<compile_context>
chip_gen: v5e
topology: v5e:2x2
jax: 0.10.0
libtpu: 0.0.40
codegen_flags: <defaults>
</compile_context>

<pallas_src>
import numpy as np
import jax
import jax.numpy as jnp
from jax import lax
from jax.experimental import pallas as pl
from jax.experimental.pallas import tpu as pltpu


# ----------------------- CrossResolutionWeighting kernel -----------------------

def _crw_kernel(x_ref, w1_ref, b1_ref, w2_ref, b2_ref, o_ref):
    # x block: (N*Hm*Wm, Ctot); BN scales pre-folded into w1/w2.
    x = x_ref[...]
    h = jnp.dot(x, w1_ref[...], preferred_element_type=jnp.float32) + b1_ref[...]
    h = jnp.maximum(h, 0.0)                                  # conv1 + BN + ReLU
    y = jnp.dot(h, w2_ref[...], preferred_element_type=jnp.float32) + b2_ref[...]
    o_ref[...] = jax.nn.sigmoid(y)                           # conv2 + BN + Sigmoid


def _crw_pallas(x2d, w1, b1, w2, b2):
    R, Ct = x2d.shape          # R = N*Hm*Wm (multiple of 8 here -> no sublane pad)
    Cm = w1.shape[1]
    return pl.pallas_call(
        _crw_kernel,
        out_shape=jax.ShapeDtypeStruct((R, Ct), jnp.float32),
        grid=(1,),
        in_specs=[
            pl.BlockSpec((R, Ct), lambda i: (0, 0)),
            pl.BlockSpec((Ct, Cm), lambda i: (0, 0)),
            pl.BlockSpec((1, Cm), lambda i: (0, 0)),
            pl.BlockSpec((Cm, Ct), lambda i: (0, 0)),
            pl.BlockSpec((1, Ct), lambda i: (0, 0)),
        ],
        out_specs=pl.BlockSpec((R, Ct), lambda i: (0, 0)),
        compiler_params=pltpu.CompilerParams(dimension_semantics=("arbitrary",)),
    )(x2d, w1, b1, w2, b2)


def _crw_ref(x2d, w1, b1, w2, b2):
    h = jnp.maximum(jnp.dot(x2d, w1, precision="highest") + b1, 0.0)
    return jax.nn.sigmoid(jnp.dot(h, w2, precision="highest") + b2)


# ------------- fused: weight-mul + depthwise 3x3 + BN + SpatialWeighting -------------

def _make_dwse_kernel(H, W):
    HW = H * W

    def kernel(x_ref, wt_ref, k_ref, b_ref, w1_ref, b1_ref, w2_ref, b2_ref, o_ref):
        # (C, H*W) slabs: C on sublanes, flattened spatial on lanes (lane-dense).
        xw = x_ref[0].astype(jnp.float32) * wt_ref[0].astype(jnp.float32)

        # lane-index edge masks for the 3x3 halo (shared across all channels)
        lane = lax.broadcasted_iota(jnp.int32, (1, HW), 1)
        col = lane % W
        row_ok_dn = lane < (H - 1) * W          # source row valid for dy = +1
        row_ok_up = lane >= W                   # source row valid for dy = -1
        col_ok_rt = col < (W - 1)               # source col valid for dx = +1
        col_ok_lf = col >= 1                    # source col valid for dx = -1

        k = k_ref[...]                          # (C, 9), BN scale pre-folded
        acc = xw * k[:, 4:5]                    # center tap (dy=0, dx=0)
        for dy in (-1, 0, 1):
            for dx in (-1, 0, 1):
                if dy == 0 and dx == 0:
                    continue
                d = dy * W + dx                 # flat lane offset of this tap
                tap = (dy + 1) * 3 + (dx + 1)
                sv = pltpu.roll(xw, shift=(-d) % HW, axis=1)   # sv[l] = xw[l + d]
                m = None
                if dy == 1:
                    m = row_ok_dn
                elif dy == -1:
                    m = row_ok_up
                if dx == 1:
                    m = col_ok_rt if m is None else jnp.logical_and(m, col_ok_rt)
                elif dx == -1:
                    m = col_ok_lf if m is None else jnp.logical_and(m, col_ok_lf)
                sv = jnp.where(m, sv, 0.0)      # zero padding at image borders
                acc = acc + sv * k[:, tap:tap + 1]
        y = acc + b_ref[...]                    # depthwise BN bias (act=None)

        # SpatialWeighting (SE): GAP -> FC+ReLU -> FC+Sigmoid -> scale (VPU only).
        gap = jnp.sum(y, axis=1, keepdims=True) * (1.0 / HW)               # (C, 1)
        h1 = jnp.maximum(jnp.sum(w1_ref[...] * gap, axis=0, keepdims=True)
                         + b1_ref[...], 0.0)                               # (1, Cr)
        sc = jax.nn.sigmoid(jnp.sum(w2_ref[...] * h1, axis=1, keepdims=True)
                            + b2_ref[...])                                 # (C, 1)
        o_ref[0] = (y * sc).astype(o_ref.dtype)

    return kernel


def _dwse_pallas(x_flat, wt_flat, H, W, k, b, w1, b1, w2, b2):
    # TODO(synk): stride=2 depthwise downsampling (Lite-HRNet transitions) not
    # implemented; stride=1 only.
    # TODO(synk): v7x second-TensorCore H-tiling: the SE global-average-pool makes a
    # single-pass H-tiled variant non-trivial (needs a cross-tile GAP accumulator and
    # a late scaling pass); batch remains the only 'parallel' grid axis here.
    N, C, HW = x_flat.shape
    Cr = w1.shape[1]
    kernel = _make_dwse_kernel(H, W)
    return pl.pallas_call(
        kernel,
        out_shape=jax.ShapeDtypeStruct((N, C, HW), x_flat.dtype),
        grid=(N,),
        in_specs=[
            pl.BlockSpec((1, C, HW), lambda n: (n, 0, 0)),
            pl.BlockSpec((1, C, HW), lambda n: (n, 0, 0)),
            pl.BlockSpec((C, 9), lambda n: (0, 0)),
            pl.BlockSpec((C, 1), lambda n: (0, 0)),
            pl.BlockSpec((C, Cr), lambda n: (0, 0)),
            pl.BlockSpec((1, Cr), lambda n: (0, 0)),
            pl.BlockSpec((C, Cr), lambda n: (0, 0)),
            pl.BlockSpec((C, 1), lambda n: (0, 0)),
        ],
        out_specs=pl.BlockSpec((1, C, HW), lambda n: (n, 0, 0)),
        compiler_params=pltpu.CompilerParams(
            dimension_semantics=("parallel",),       # megacore batch split on v7x
            vmem_limit_bytes=32 * 1024 * 1024),      # room for in+out double buffers
    )(x_flat, wt_flat, k, b, w1, b1, w2, b2)


def _dwse_ref(x_flat, wt_flat, H, W, k, b, w1, b1, w2, b2):
    N, C, HW = x_flat.shape
    x = x_flat.reshape(N, C, H, W).astype(jnp.float32)
    wt = wt_flat.reshape(N, C, H, W).astype(jnp.float32)
    xp = jnp.pad(x * wt, ((0, 0), (0, 0), (1, 1), (1, 1)))
    acc = jnp.zeros_like(x)
    for ky in range(3):
        for kx in range(3):
            acc = acc + xp[:, :, ky:ky + H, kx:kx + W] * k[:, ky * 3 + kx].reshape(1, C, 1, 1)
    y = acc + b.reshape(1, C, 1, 1)
    gap = jnp.mean(y, axis=(2, 3))                                        # (N, C)
    h1 = jnp.maximum(jnp.einsum('nc,cr->nr', gap, w1) + b1.reshape(1, -1), 0.0)
    s = jax.nn.sigmoid(jnp.einsum('nr,cr->nc', h1, w2) + b2.reshape(1, -1))
    return (y * s[:, :, None, None]).reshape(N, C, HW)


# --------------------------------- module forward ---------------------------------

def conditional_channel_weighting(xs_nchw, params, branch_channels,
                                  use_pallas=True, io_dtype=jnp.float32):
    """ConditionalChannelWeighting forward (stride=1, eval-mode BN).  NCHW in/out."""
    xs = [x.astype(jnp.float32) for x in xs_nchw]
    x1 = [x[:, : x.shape[1] // 2] for x in xs]                 # s.chunk(2, dim=1)[0]
    x2 = [x[:, x.shape[1] // 2:] for x in xs]                  # s.chunk(2, dim=1)[1]

    # --- CrossResolutionWeighting on the tiny pooled tensor ---
    N = x2[0].shape[0]
    Hm, Wm = x2[-1].shape[2:]
    pooled = []
    for s in x2[:-1]:
        C_, H_, W_ = s.shape[1:]
        assert H_ % Hm == 0 and W_ % Wm == 0, "adaptive pool needs integer factors"
        fh, fw = H_ // Hm, W_ // Wm
        pooled.append(s.reshape(N, C_, Hm, fh, Wm, fw).mean(axis=(3, 5)))
    pooled.append(x2[-1])
    cat = jnp.concatenate(pooled, axis=1)                      # (N, Ctot, Hm, Wm)
    cat2d = jnp.transpose(cat, (0, 2, 3, 1)).reshape(N * Hm * Wm, -1)   # tiny

    p = params["crw"]
    crw_fn = _crw_pallas if use_pallas else _crw_ref
    w = crw_fn(cat2d, p["w1"], p["b1"], p["w2"], p["b2"])      # (R, Ctot), in (0,1)
    w = w.reshape(N, Hm, Wm, -1)
    wsplit = jnp.split(w, np.cumsum(branch_channels)[:-1].tolist(), axis=-1)

    # --- per-branch fused kernel: weight multiply + depthwise 3x3 + BN + SE ---
    dwse_fn = _dwse_pallas if use_pallas else _dwse_ref
    outs = []
    for i, (s, a) in enumerate(zip(x2, wsplit)):
        C_, H_, W_ = s.shape[1:]
        fh, fw = H_ // Hm, W_ // Wm
        # nearest-upsample the tiny weight map wrapper-side (NCHW, then flatten).
        # TODO(synk): fold this upsample into the kernel's lane-index math to avoid
        # one extra full-size HBM read of the upsampled map on non-bottom branches.
        a_nchw = jnp.transpose(a, (0, 3, 1, 2))                # (N, C, Hm, Wm), tiny
        a_up = jnp.repeat(jnp.repeat(a_nchw, fh, axis=2), fw, axis=3)

        pdw, pse = params["dw"][i], params["se"][i]
        y = dwse_fn(s.reshape(N, C_, H_ * W_).astype(io_dtype),
                    a_up.reshape(N, C_, H_ * W_).astype(io_dtype),
                    H_, W_, pdw["k"], pdw["b"],
                    pse["w1"], pse["b1"], pse["w2"], pse["b2"])
        y = y.reshape(N, C_, H_, W_).astype(jnp.float32)

        # concat([x1, y], dim=1) + channel_shuffle(groups=2) in one interleave:
        # out[:, 2j] = x1[:, j], out[:, 2j+1] = y[:, j]
        outs.append(jnp.stack([x1[i], y], axis=2).reshape(N, 2 * C_, H_, W_))
    return outs


# --------------------------------- parameter init ---------------------------------

def init_params(in_channels, reduce_ratio, key):
    eps = 1e-5
    bc = [c // 2 for c in in_channels]
    Ct = sum(bc)
    Cm = Ct // reduce_ratio
    keys = iter(jax.random.split(key, 64))

    def nrm(shape, scale=0.2):
        return scale * jax.random.normal(next(keys), shape, jnp.float32)

    def bn_fold(c):
        gamma = 1.0 + nrm((c,), 0.1)
        beta = nrm((c,), 0.1)
        mean = nrm((c,), 0.1)
        var = 1.0 + jnp.abs(nrm((c,), 0.1))
        s = gamma / jnp.sqrt(var + eps)
        b = beta - mean * s
        return s, b

    params = {}
    # CrossResolutionWeighting: 1x1 convs (bias=False) + BN; BN scale folded into W.
    w1 = nrm((Cm, Ct)).T                   # torch (Cm, Ct, 1, 1) -> (Ct, Cm)
    s1, b1 = bn_fold(Cm)
    w2 = nrm((Ct, Cm)).T                   # torch (Ct, Cm, 1, 1) -> (Cm, Ct)
    s2, b2 = bn_fold(Ct)
    params["crw"] = dict(w1=w1 * s1[None, :], b1=b1.reshape(1, Cm),
                         w2=w2 * s2[None, :], b2=b2.reshape(1, Ct))

    params["dw"], params["se"] = [], []
    for c in bc:
        k9 = nrm((c, 9))                   # torch (c, 1, 3, 3) -> (c, 9), taps row-major
        s, b = bn_fold(c)
        params["dw"].append(dict(k=k9 * s[:, None], b=b.reshape(c, 1)))
        cr = c // 4                        # SpatialWeighting ratio=4 (bias=True, no BN)
        params["se"].append(dict(
            w1=nrm((cr, c)).T,             # torch (cr, c, 1, 1) -> (c, cr)
            b1=nrm((cr,)).reshape(1, cr),
            w2=nrm((c, cr)),               # torch (c, cr, 1, 1) -> (c, cr)
            b2=nrm((c,)).reshape(c, 1)))
    return params, bc


# -------------------------------------- main ---------------------------------------

if __name__ == "__main__":
    key = jax.random.PRNGKey(0)
    kx0, kx1, kp = jax.random.split(key, 3)

    in_channels = [8, 16]      # two-branch Lite-HRNet stage
    reduce_ratio = 4

    x0 = jax.random.normal(kx0, (2, 8, 32, 32), jnp.float32)    # NCHW, branch 0
    x1 = jax.random.normal(kx1, (2, 16, 16, 16), jnp.float32)   # NCHW, branch 1

    params, branch_channels = init_params(in_channels, reduce_ratio, kp)

    refs = conditional_channel_weighting([x0, x1], params, branch_channels,
                                         use_pallas=False, io_dtype=jnp.float32)
    refs = jax.block_until_ready(refs)

    outs_f32 = conditional_channel_weighting([x0, x1], params, branch_channels,
                                             use_pallas=True, io_dtype=jnp.float32)
    outs_f32 = jax.block_until_ready(outs_f32)

    outs_bf16 = conditional_channel_weighting([x0, x1], params, branch_channels,
                                              use_pallas=True, io_dtype=jnp.bfloat16)
    outs_bf16 = jax.block_until_ready(outs_bf16)

    for o, r, xin in zip(outs_f32, refs, [x0, x1]):
        assert o.shape == xin.shape, (o.shape, xin.shape)
        np.testing.assert_allclose(np.asarray(o), np.asarray(r), rtol=1e-2, atol=1e-2)
    for o, r in zip(outs_bf16, refs):
        np.testing.assert_allclose(np.asarray(o), np.asarray(r), rtol=5e-2, atol=5e-2)

    print("KERNEL_OK")
</pallas_src>

<mosaic_0001>
module attributes {stable_mosaic.version = 11 : i64} {
  func.func @_crw_kernel(%arg0: i32, %arg1: memref<512x12xf32, #tpu.memory_space<vmem>>, %arg2: memref<12x3xf32, #tpu.memory_space<vmem>>, %arg3: memref<1x3xf32, #tpu.memory_space<vmem>>, %arg4: memref<3x12xf32, #tpu.memory_space<vmem>>, %arg5: memref<1x12xf32, #tpu.memory_space<vmem>>, %arg6: memref<512x12xf32, #tpu.memory_space<vmem>>) attributes {dimension_semantics = [#tpu.dimension_semantics<arbitrary>], iteration_bounds = array<i64: 1>, scalar_prefetch = 0 : i64, scratch_operands = 0 : i64, tpu.core_type = #tpu.core_type<tc>, window_params = [{pipeline_mode = #tpu.pipeline_mode<synchronous>, transform_indices = @transform_0, window_bounds = array<i64: 512, 12>}, {pipeline_mode = #tpu.pipeline_mode<synchronous>, transform_indices = @transform_1, window_bounds = array<i64: 12, 3>}, {pipeline_mode = #tpu.pipeline_mode<synchronous>, transform_indices = @transform_2, window_bounds = array<i64: 1, 3>}, {pipeline_mode = #tpu.pipeline_mode<synchronous>, transform_indices = @transform_3, window_bounds = array<i64: 3, 12>}, {pipeline_mode = #tpu.pipeline_mode<synchronous>, transform_indices = @transform_4, window_bounds = array<i64: 1, 12>}, {pipeline_mode = #tpu.pipeline_mode<synchronous>, transform_indices = @transform_5, window_bounds = array<i64: 512, 12>}]} {
    %c0 = arith.constant 0 : index
    %c0_0 = arith.constant 0 : index
    %0 = vector.load %arg1[%c0, %c0_0] : memref<512x12xf32, #tpu.memory_space<vmem>>, vector<512x12xf32>
    %c0_1 = arith.constant 0 : index
    %c0_2 = arith.constant 0 : index
    %1 = vector.load %arg2[%c0_1, %c0_2] : memref<12x3xf32, #tpu.memory_space<vmem>>, vector<12x3xf32>
    %cst = arith.constant dense<0.000000e+00> : vector<512x3xf32>
    %2 = tpu.matmul %0, %1, %cst {dimension_numbers = #tpu.dot_dimension_numbers<[1], [0], [0], [1], [0, 0, 1, 1], [], []>} : vector<512x12xf32>, vector<12x3xf32>, vector<512x3xf32> -> vector<512x3xf32>
    %c0_3 = arith.constant 0 : index
    %c0_4 = arith.constant 0 : index
    %3 = vector.load %arg3[%c0_3, %c0_4] : memref<1x3xf32, #tpu.memory_space<vmem>>, vector<1x3xf32>
    %4 = vector.broadcast %3 : vector<1x3xf32> to vector<512x3xf32>
    %5 = arith.addf %2, %4 : vector<512x3xf32>
    %cst_5 = arith.constant 0.000000e+00 : f32
    %6 = vector.broadcast %cst_5 : f32 to vector<512x3xf32>
    %7 = arith.maximumf %5, %6 : vector<512x3xf32>
    %c0_6 = arith.constant 0 : index
    %c0_7 = arith.constant 0 : index
    %8 = vector.load %arg4[%c0_6, %c0_7] : memref<3x12xf32, #tpu.memory_space<vmem>>, vector<3x12xf32>
    %cst_8 = arith.constant dense<0.000000e+00> : vector<512x12xf32>
    %9 = tpu.matmul %7, %8, %cst_8 {dimension_numbers = #tpu.dot_dimension_numbers<[1], [0], [0], [1], [0, 0, 1, 1], [], []>} : vector<512x3xf32>, vector<3x12xf32>, vector<512x12xf32> -> vector<512x12xf32>
    %c0_9 = arith.constant 0 : index
    %c0_10 = arith.constant 0 : index
    %10 = vector.load %arg5[%c0_9, %c0_10] : memref<1x12xf32, #tpu.memory_space<vmem>>, vector<1x12xf32>
    %11 = vector.broadcast %10 : vector<1x12xf32> to vector<512x12xf32>
    %12 = arith.addf %9, %11 : vector<512x12xf32>
    %13 = arith.negf %12 : vector<512x12xf32>
    %14 = math.exp %13 : vector<512x12xf32>
    %cst_11 = arith.constant 1.000000e+00 : f32
    %15 = vector.broadcast %cst_11 : f32 to vector<512x12xf32>
    %16 = arith.addf %15, %14 : vector<512x12xf32>
    %17 = arith.divf %15, %16 : vector<512x12xf32>
    %c0_12 = arith.constant 0 : index
    %c0_13 = arith.constant 0 : index
    %18 = vector.load %arg6[%c0_12, %c0_13] : memref<512x12xf32, #tpu.memory_space<vmem>>, vector<512x12xf32>
    tpu.vector_store %arg6[%c0_12, %c0_13], %17 {strides = array<i32>} : memref<512x12xf32, #tpu.memory_space<vmem>>, vector<512x12xf32>,
    return
  }
  func.func @transform_0(%arg0: i32) -> (i32, i32) {
    %c0_i32 = arith.constant 0 : i32
    %c0_i32_0 = arith.constant 0 : i32
    %c0_i32_1 = arith.constant 0 : i32
    return %c0_i32, %c0_i32_0 : i32, i32
  }
  func.func @transform_1(%arg0: i32) -> (i32, i32) {
    %c0_i32 = arith.constant 0 : i32
    %c0_i32_0 = arith.constant 0 : i32
    %c0_i32_1 = arith.constant 0 : i32
    return %c0_i32, %c0_i32_0 : i32, i32
  }
  func.func @transform_2(%arg0: i32) -> (i32, i32) {
    %c0_i32 = arith.constant 0 : i32
    %c0_i32_0 = arith.constant 0 : i32
    %c0_i32_1 = arith.constant 0 : i32
    return %c0_i32, %c0_i32_0 : i32, i32
  }
  func.func @transform_3(%arg0: i32) -> (i32, i32) {
    %c0_i32 = arith.constant 0 : i32
    %c0_i32_0 = arith.constant 0 : i32
    %c0_i32_1 = arith.constant 0 : i32
    return %c0_i32, %c0_i32_0 : i32, i32
  }
  func.func @transform_4(%arg0: i32) -> (i32, i32) {
    %c0_i32 = arith.constant 0 : i32
    %c0_i32_0 = arith.constant 0 : i32
    %c0_i32_1 = arith.constant 0 : i32
    return %c0_i32, %c0_i32_0 : i32, i32
  }
  func.func @transform_5(%arg0: i32) -> (i32, i32) {
    %c0_i32 = arith.constant 0 : i32
    %c0_i32_0 = arith.constant 0 : i32
    %c0_i32_1 = arith.constant 0 : i32
    return %c0_i32, %c0_i32_0 : i32, i32
  }
}

</mosaic_0001>

<llo_original>
// kernel: tpu_custom_call.1
$region0: #{tpu_custom_call.1}
  #allocation0 [shape = 'u32[]', space=smem, size = 0x4, offset = 0x4, fixed_abs, tag = 'smem constant byte address 0x4 - core index']
  #allocation1 [shape = 'u32[72,128]{1,0:T(1,128)}', space=vmem, size = 0x9000, scoped, tag = 'internal scratch']
  %s0 = inlined_call_operand.vmem [shape: f32[512,12], index: 0, kind: input, shape index: {}]
  %s1 = inlined_call_operand.vmem [shape: f32[12,3], index: 1, kind: input, shape index: {}]
  %s2 = inlined_call_operand.vmem [shape: f32[1,3], index: 2, kind: input, shape index: {}]
  %s3 = inlined_call_operand.vmem [shape: f32[3,12], index: 3, kind: input, shape index: {}]
  %s4 = inlined_call_operand.vmem [shape: f32[1,12], index: 4, kind: input, shape index: {}]
  %s5 = inlined_call_operand.vmem [shape: f32[512,12], index: 5, kind: output, shape index: {}]
  %s6 = sld [smem:[#allocation0]]
  $region30: #{tpu_custom_call.1} parent=0
    _
  %s8 = ssub.s32 1, %s6
  %s9 = scalar_select 0, %s8, %s6
  // Predicated region
  $region2: #{tpu_custom_call.1} parent=0 // pred_check
    _
  $region3: #{tpu_custom_call.1} parent=0 // pred_check_branch
    %11 = sbr.rel (0) target = $region5
  $region4: #{tpu_custom_call.1} parent=0 // pred_region
    _
  $region5: #{tpu_custom_call.1} parent=0 // pred_fallthru
    _
  // Predicated region
  $region6: #{tpu_custom_call.1} parent=0 // pred_check
    _
  $region7: #{tpu_custom_call.1} parent=0 // pred_check_branch
    %13 = sbr.rel (0) target = $region9
  $region8: #{tpu_custom_call.1} parent=0 // pred_region
    _
  $region9: #{tpu_custom_call.1} parent=0 // pred_fallthru
    _
  // Predicated region
  $region10: #{tpu_custom_call.1} parent=0 // pred_check
    _
  $region11: #{tpu_custom_call.1} parent=0 // pred_check_branch
    %15 = sbr.rel (0) target = $region13
  $region12: #{tpu_custom_call.1} parent=0 // pred_region
    _
  $region13: #{tpu_custom_call.1} parent=0 // pred_fallthru
    _
  // Predicated region
  $region14: #{tpu_custom_call.1} parent=0 // pred_check
    _
  $region15: #{tpu_custom_call.1} parent=0 // pred_check_branch
    %17 = sbr.rel (0) target = $region17
  $region16: #{tpu_custom_call.1} parent=0 // pred_region
    _
  $region17: #{tpu_custom_call.1} parent=0 // pred_fallthru
    _
  // Predicated region
  $region18: #{tpu_custom_call.1} parent=0 // pred_check
    _
  $region19: #{tpu_custom_call.1} parent=0 // pred_check_branch
    %19 = sbr.rel (0) target = $region21
  $region20: #{tpu_custom_call.1} parent=0 // pred_region
    _
  $region21: #{tpu_custom_call.1} parent=0 // pred_fallthru
    _
  %v20 = vld [vmem:[%s0] sm:$0xff]
  %v21 = vld [vmem:[%s0 + $0x8] sm:$0xff]
  %v22 = vld [vmem:[%s0 + $0x10] sm:$0xff]
  %v23 = vld [vmem:[%s0 + $0x18] sm:$0xff]
  %v24 = vld [vmem:[%s0 + $0x20] sm:$0xff]
  %v25 = vld [vmem:[%s0 + $0x28] sm:$0xff]
  %v26 = vld [vmem:[%s0 + $0x30] sm:$0xff]
  %v27 = vld [vmem:[%s0 + $0x38] sm:$0xff]
  %v28 = vld [vmem:[%s0 + $0x40] sm:$0xff]
  %v29 = vld [vmem:[%s0 + $0x48] sm:$0xff]
  %v30 = vld [vmem:[%s0 + $0x50] sm:$0xff]
  %v31 = vld [vmem:[%s0 + $0x58] sm:$0xff]
  %v32 = vld [vmem:[%s0 + $0x60] sm:$0xff]
  %v33 = vld [vmem:[%s0 + $0x68] sm:$0xff]
  %v34 = vld [vmem:[%s0 + $0x70] sm:$0xff]
  %v35 = vld [vmem:[%s0 + $0x78] sm:$0xff]
  %v36 = vld [vmem:[%s0 + $0x80] sm:$0xff]
  %v37 = vld [vmem:[%s0 + $0x88] sm:$0xff]
  %v38 = vld [vmem:[%s0 + $0x90] sm:$0xff]
  %v39 = vld [vmem:[%s0 + $0x98] sm:$0xff]
  %v40 = vld [vmem:[%s0 + $0xa0] sm:$0xff]
  %v41 = vld [vmem:[%s0 + $0xa8] sm:$0xff]
  %v42 = vld [vmem:[%s0 + $0xb0] sm:$0xff]
  %v43 = vld [vmem:[%s0 + $0xb8] sm:$0xff]
  %v44 = vld [vmem:[%s0 + $0xc0] sm:$0xff]
  %v45 = vld [vmem:[%s0 + $0xc8] sm:$0xff]
  %v46 = vld [vmem:[%s0 + $0xd0] sm:$0xff]
  %v47 = vld [vmem:[%s0 + $0xd8] sm:$0xff]
  %v48 = vld [vmem:[%s0 + $0xe0] sm:$0xff]
  %v49 = vld [vmem:[%s0 + $0xe8] sm:$0xff]
  %v50 = vld [vmem:[%s0 + $0xf0] sm:$0xff]
  %v51 = vld [vmem:[%s0 + $0xf8] sm:$0xff]
  %v52 = vld [vmem:[%s0 + $0x100] sm:$0xff]
  %v53 = vld [vmem:[%s0 + $0x108] sm:$0xff]
  %v54 = vld [vmem:[%s0 + $0x110] sm:$0xff]
  %v55 = vld [vmem:[%s0 + $0x118] sm:$0xff]
  %v56 = vld [vmem:[%s0 + $0x120] sm:$0xff]
  %v57 = vld [vmem:[%s0 + $0x128] sm:$0xff]
  %v58 = vld [vmem:[%s0 + $0x130] sm:$0xff]
  %v59 = vld [vmem:[%s0 + $0x138] sm:$0xff]
  %v60 = vld [vmem:[%s0 + $0x140] sm:$0xff]
  %v61 = vld [vmem:[%s0 + $0x148] sm:$0xff]
  %v62 = vld [vmem:[%s0 + $0x150] sm:$0xff]
  %v63 = vld [vmem:[%s0 + $0x158] sm:$0xff]
  %v64 = vld [vmem:[%s0 + $0x160] sm:$0xff]
  %v65 = vld [vmem:[%s0 + $0x168] sm:$0xff]
  %v66 = vld [vmem:[%s0 + $0x170] sm:$0xff]
  %v67 = vld [vmem:[%s0 + $0x178] sm:$0xff]
  %v68 = vld [vmem:[%s0 + $0x180] sm:$0xff]
  %v69 = vld [vmem:[%s0 + $0x188] sm:$0xff]
  %v70 = vld [vmem:[%s0 + $0x190] sm:$0xff]
  %v71 = vld [vmem:[%s0 + $0x198] sm:$0xff]
  %v72 = vld [vmem:[%s0 + $0x1a0] sm:$0xff]
  %v73 = vld [vmem:[%s0 + $0x1a8] sm:$0xff]
  %v74 = vld [vmem:[%s0 + $0x1b0] sm:$0xff]
  %v75 = vld [vmem:[%s0 + $0x1b8] sm:$0xff]
  %v76 = vld [vmem:[%s0 + $0x1c0] sm:$0xff]
  %v77 = vld [vmem:[%s0 + $0x1c8] sm:$0xff]
  %v78 = vld [vmem:[%s0 + $0x1d0] sm:$0xff]
  %v79 = vld [vmem:[%s0 + $0x1d8] sm:$0xff]
  %v80 = vld [vmem:[%s0 + $0x1e0] sm:$0xff]
  %v81 = vld [vmem:[%s0 + $0x1e8] sm:$0xff]
  %v82 = vld [vmem:[%s0 + $0x1f0] sm:$0xff]
  %v83 = vld [vmem:[%s0 + $0x1f8] sm:$0xff]
  %v84 = vld [vmem:[%s1] sm:$0xff]
  %v85 = vld [vmem:[%s1 + $0x8] sm:$0xf]
  %v86 = vld [vmem:[%s2] sm:$0x1]
  %v88 = vperm.slane %v86, 0
  %vm90 = vcmask 97280
  %v92 = vsel %vm90, %v20, 0
  %v95 = vsel %vm90, %v21, 0
  %v98 = vsel %vm90, %v22, 0
  %v101 = vsel %vm90, %v23, 0
  %v104 = vsel %vm90, %v24, 0
  %v107 = vsel %vm90, %v25, 0
  %v110 = vsel %vm90, %v26, 0
  %v113 = vsel %vm90, %v27, 0
  %v116 = vsel %vm90, %v28, 0
  %v119 = vsel %vm90, %v29, 0
  %v122 = vsel %vm90, %v30, 0
  %v125 = vsel %vm90, %v31, 0
  %v128 = vsel %vm90, %v32, 0
  %v131 = vsel %vm90, %v33, 0
  %v134 = vsel %vm90, %v34, 0
  %v137 = vsel %vm90, %v35, 0
  %v140 = vsel %vm90, %v36, 0
  %v143 = vsel %vm90, %v37, 0
  %v146 = vsel %vm90, %v38, 0
  %v149 = vsel %vm90, %v39, 0
  %v152 = vsel %vm90, %v40, 0
  %v155 = vsel %vm90, %v41, 0
  %v158 = vsel %vm90, %v42, 0
  %v161 = vsel %vm90, %v43, 0
  %v164 = vsel %vm90, %v44, 0
  %v167 = vsel %vm90, %v45, 0
  %v170 = vsel %vm90, %v46, 0
  %v173 = vsel %vm90, %v47, 0
  %v176 = vsel %vm90, %v48, 0
  %v179 = vsel %vm90, %v49, 0
  %v182 = vsel %vm90, %v50, 0
  %v185 = vsel %vm90, %v51, 0
  %v188 = vsel %vm90, %v52, 0
  %v191 = vsel %vm90, %v53, 0
  %v194 = vsel %vm90, %v54, 0
  %v197 = vsel %vm90, %v55, 0
  %v200 = vsel %vm90, %v56, 0
  %v203 = vsel %vm90, %v57, 0
  %v206 = vsel %vm90, %v58, 0
  %v209 = vsel %vm90, %v59, 0
  %v212 = vsel %vm90, %v60, 0
  %v215 = vsel %vm90, %v61, 0
  %v218 = vsel %vm90, %v62, 0
  %v221 = vsel %vm90, %v63, 0
  %v224 = vsel %vm90, %v64, 0
  %v227 = vsel %vm90, %v65, 0
  %v230 = vsel %vm90, %v66, 0
  %v233 = vsel %vm90, %v67, 0
  %v236 = vsel %vm90, %v68, 0
  %v239 = vsel %vm90, %v69, 0
  %v242 = vsel %vm90, %v70, 0
  %v245 = vsel %vm90, %v71, 0
  %v248 = vsel %vm90, %v72, 0
  %v251 = vsel %vm90, %v73, 0
  %v254 = vsel %vm90, %v74, 0
  %v257 = vsel %vm90, %v75, 0
  %v260 = vsel %vm90, %v76, 0
  %v263 = vsel %vm90, %v77, 0
  %v266 = vsel %vm90, %v78, 0
  %v269 = vsel %vm90, %v79, 0
  %v272 = vsel %vm90, %v80, 0
  %v275 = vsel %vm90, %v81, 0
  %v278 = vsel %vm90, %v82, 0
  %v281 = vsel %vm90, %v83, 0
  %vm283 = vcmask 1043456
  %v285 = vsel %vm283, %v85, 0
  %287 = vmatpush.msra.mxu0 0.0
  %288 = vmatpush.msra.mxu0 0.0
  %289 = vmatpush.msra.mxu0 0.0
  %290 = vmatpush.msra.mxu0 0.0
  %291 = vmatpush.msra.mxu0 0.0
  %292 = vmatpush.msra.mxu0 0.0
  %293 = vmatpush.msra.mxu0 0.0
  %294 = vmatpush.msra.mxu0 0.0
  %295 = vmatpush.msra.mxu0 0.0
  %296 = vmatpush.msra.mxu0 0.0
  %297 = vmatpush.msra.mxu0 0.0
  %298 = vmatpush.msra.mxu0 0.0
  %299 = vmatpush.msra.mxu0 0.0
  %300 = vmatpush.msra.mxu0 0.0
  %301 = vmatpush.msra.mxu0 %v285
  %302 = vmatpush.msra.mxu0 %v84
  %303 = vmatmul.f32.gmra.mxu0 %v92
  %v304 = vpop.f32.mrf.mxu0
  %v305 = vadd.f32 %v88, %v304
  %306 = vmatmul.f32.gmra.mxu0 %v95
  %v307 = vpop.f32.mrf.mxu0
  %v308 = vadd.f32 %v88, %v307
  %309 = vmatmul.f32.gmra.mxu0 %v98
  %v310 = vpop.f32.mrf.mxu0
  %v311 = vadd.f32 %v88, %v310
  %312 = vmatmul.f32.gmra.mxu0 %v101
  %v313 = vpop.f32.mrf.mxu0
  %v314 = vadd.f32 %v88, %v313
  %315 = vmatmul.f32.gmra.mxu0 %v104
  %v316 = vpop.f32.mrf.mxu0
  %v317 = vadd.f32 %v88, %v316
  %318 = vmatmul.f32.gmra.mxu0 %v107
  %v319 = vpop.f32.mrf.mxu0
  %v320 = vadd.f32 %v88, %v319
  %321 = vmatmul.f32.gmra.mxu0 %v110
  %v322 = vpop.f32.mrf.mxu0
  %v323 = vadd.f32 %v88, %v322
  %324 = vmatmul.f32.gmra.mxu0 %v113
  %v325 = vpop.f32.mrf.mxu0
  %v326 = vadd.f32 %v88, %v325
  %327 = vmatmul.f32.gmra.mxu0 %v116
  %v328 = vpop.f32.mrf.mxu0
  %v329 = vadd.f32 %v88, %v328
  %330 = vmatmul.f32.gmra.mxu0 %v119
  %v331 = vpop.f32.mrf.mxu0
  %v332 = vadd.f32 %v88, %v331
  %333 = vmatmul.f32.gmra.mxu0 %v122
  %v334 = vpop.f32.mrf.mxu0
  %v335 = vadd.f32 %v88, %v334
  %336 = vmatmul.f32.gmra.mxu0 %v125
  %v337 = vpop.f32.mrf.mxu0
  %v338 = vadd.f32 %v88, %v337
  %339 = vmatmul.f32.gmra.mxu0 %v128
  %v340 = vpop.f32.mrf.mxu0
  %v341 = vadd.f32 %v88, %v340
  %342 = vmatmul.f32.gmra.mxu0 %v131
  %v343 = vpop.f32.mrf.mxu0
  %v344 = vadd.f32 %v88, %v343
  %345 = vmatmul.f32.gmra.mxu0 %v134
  %v346 = vpop.f32.mrf.mxu0
  %v347 = vadd.f32 %v88, %v346
  %348 = vmatmul.f32.gmra.mxu0 %v137
  %v349 = vpop.f32.mrf.mxu0
  %v350 = vadd.f32 %v88, %v349
  %351 = vmatmul.f32.gmra.mxu0 %v140
  %v352 = vpop.f32.mrf.mxu0
  %v353 = vadd.f32 %v88, %v352
  %354 = vmatmul.f32.gmra.mxu0 %v143
  %v355 = vpop.f32.mrf.mxu0
  %v356 = vadd.f32 %v88, %v355
  %357 = vmatmul.f32.gmra.mxu0 %v146
  %v358 = vpop.f32.mrf.mxu0
  %v359 = vadd.f32 %v88, %v358
  %360 = vmatmul.f32.gmra.mxu0 %v149
  %v361 = vpop.f32.mrf.mxu0
  %v362 = vadd.f32 %v88, %v361
  %363 = vmatmul.f32.gmra.mxu0 %v152
  %v364 = vpop.f32.mrf.mxu0
  %v365 = vadd.f32 %v88, %v364
  %366 = vmatmul.f32.gmra.mxu0 %v155
  %v367 = vpop.f32.mrf.mxu0
  %v368 = vadd.f32 %v88, %v367
  %369 = vmatmul.f32.gmra.mxu0 %v158
  %v370 = vpop.f32.mrf.mxu0
  %v371 = vadd.f32 %v88, %v370
  %372 = vmatmul.f32.gmra.mxu0 %v161
  %v373 = vpop.f32.mrf.mxu0
  %v374 = vadd.f32 %v88, %v373
  %375 = vmatmul.f32.gmra.mxu0 %v164
  %v376 = vpop.f32.mrf.mxu0
  %v377 = vadd.f32 %v88, %v376
  %378 = vmatmul.f32.gmra.mxu0 %v167
  %v379 = vpop.f32.mrf.mxu0
  %v380 = vadd.f32 %v88, %v379
  %381 = vmatmul.f32.gmra.mxu0 %v170
  %v382 = vpop.f32.mrf.mxu0
  %v383 = vadd.f32 %v88, %v382
  %384 = vmatmul.f32.gmra.mxu0 %v173
  %v385 = vpop.f32.mrf.mxu0
  %v386 = vadd.f32 %v88, %v385
  %387 = vmatmul.f32.gmra.mxu0 %v176
  %v388 = vpop.f32.mrf.mxu0
  %v389 = vadd.f32 %v88, %v388
  %390 = vmatmul.f32.gmra.mxu0 %v179
  %v391 = vpop.f32.mrf.mxu0
  %v392 = vadd.f32 %v88, %v391
  %393 = vmatmul.f32.gmra.mxu0 %v182
  %v394 = vpop.f32.mrf.mxu0
  %v395 = vadd.f32 %v88, %v394
  %396 = vmatmul.f32.gmra.mxu0 %v185
  %v397 = vpop.f32.mrf.mxu0
  %v398 = vadd.f32 %v88, %v397
  %399 = vmatmul.f32.gmra.mxu0 %v188
  %v400 = vpop.f32.mrf.mxu0
  %v401 = vadd.f32 %v88, %v400
  %402 = vmatmul.f32.gmra.mxu0 %v191
  %v403 = vpop.f32.mrf.mxu0
  %v404 = vadd.f32 %v88, %v403
  %405 = vmatmul.f32.gmra.mxu0 %v194
  %v406 = vpop.f32.mrf.mxu0
  %v407 = vadd.f32 %v88, %v406
  %408 = vmatmul.f32.gmra.mxu0 %v197
  %v409 = vpop.f32.mrf.mxu0
  %v410 = vadd.f32 %v88, %v409
  %411 = vmatmul.f32.gmra.mxu0 %v200
  %v412 = vpop.f32.mrf.mxu0
  %v413 = vadd.f32 %v88, %v412
  %414 = vmatmul.f32.gmra.mxu0 %v203
  %v415 = vpop.f32.mrf.mxu0
  %v416 = vadd.f32 %v88, %v415
  %417 = vmatmul.f32.gmra.mxu0 %v206
  %v418 = vpop.f32.mrf.mxu0
  %v419 = vadd.f32 %v88, %v418
  %420 = vmatmul.f32.gmra.mxu0 %v209
  %v421 = vpop.f32.mrf.mxu0
  %v422 = vadd.f32 %v88, %v421
  %423 = vmatmul.f32.gmra.mxu0 %v212
  %v424 = vpop.f32.mrf.mxu0
  %v425 = vadd.f32 %v88, %v424
  %426 = vmatmul.f32.gmra.mxu0 %v215
  %v427 = vpop.f32.mrf.mxu0
  %v428 = vadd.f32 %v88, %v427
  %429 = vmatmul.f32.gmra.mxu0 %v218
  %v430 = vpop.f32.mrf.mxu0
  %v431 = vadd.f32 %v88, %v430
  %432 = vmatmul.f32.gmra.mxu0 %v221
  %v433 = vpop.f32.mrf.mxu0
  %v434 = vadd.f32 %v88, %v433
  %435 = vmatmul.f32.gmra.mxu0 %v224
  %v436 = vpop.f32.mrf.mxu0
  %v437 = vadd.f32 %v88, %v436
  %438 = vmatmul.f32.gmra.mxu0 %v227
  %v439 = vpop.f32.mrf.mxu0
  %v440 = vadd.f32 %v88, %v439
  %441 = vmatmul.f32.gmra.mxu0 %v230
  %v442 = vpop.f32.mrf.mxu0
  %v443 = vadd.f32 %v88, %v442
  %444 = vmatmul.f32.gmra.mxu0 %v233
  %v445 = vpop.f32.mrf.mxu0
  %v446 = vadd.f32 %v88, %v445
  %447 = vmatmul.f32.gmra.mxu0 %v236
  %v448 = vpop.f32.mrf.mxu0
  %v449 = vadd.f32 %v88, %v448
  %450 = vmatmul.f32.gmra.mxu0 %v239
  %v451 = vpop.f32.mrf.mxu0
  %v452 = vadd.f32 %v88, %v451
  %453 = vmatmul.f32.gmra.mxu0 %v242
  %v454 = vpop.f32.mrf.mxu0
  %v455 = vadd.f32 %v88, %v454
  %456 = vmatmul.f32.gmra.mxu0 %v245
  %v457 = vpop.f32.mrf.mxu0
  %v458 = vadd.f32 %v88, %v457
  %459 = vmatmul.f32.gmra.mxu0 %v248
  %v460 = vpop.f32.mrf.mxu0
  %v461 = vadd.f32 %v88, %v460
  %462 = vmatmul.f32.gmra.mxu0 %v251
  %v463 = vpop.f32.mrf.mxu0
  %v464 = vadd.f32 %v88, %v463
  %465 = vmatmul.f32.gmra.mxu0 %v254
  %v466 = vpop.f32.mrf.mxu0
  %v467 = vadd.f32 %v88, %v466
  %468 = vmatmul.f32.gmra.mxu0 %v257
  %v469 = vpop.f32.mrf.mxu0
  %v470 = vadd.f32 %v88, %v469
  %471 = vmatmul.f32.gmra.mxu0 %v260
  %v472 = vpop.f32.mrf.mxu0
  %v473 = vadd.f32 %v88, %v472
  %474 = vmatmul.f32.gmra.mxu0 %v263
  %v475 = vpop.f32.mrf.mxu0
  %v476 = vadd.f32 %v88, %v475
  %477 = vmatmul.f32.gmra.mxu0 %v266
  %v478 = vpop.f32.mrf.mxu0
  %v479 = vadd.f32 %v88, %v478
  %480 = vmatmul.f32.gmra.mxu0 %v269
  %v481 = vpop.f32.mrf.mxu0
  %v482 = vadd.f32 %v88, %v481
  %483 = vmatmul.f32.gmra.mxu0 %v272
  %v484 = vpop.f32.mrf.mxu0
  %v485 = vadd.f32 %v88, %v484
  %486 = vmatmul.f32.gmra.mxu0 %v275
  %v487 = vpop.f32.mrf.mxu0
  %v488 = vadd.f32 %v88, %v487
  %489 = vmatmul.f32.gmra.mxu0 %v278
  %v490 = vpop.f32.mrf.mxu0
  %v491 = vadd.f32 %v88, %v490
  %492 = vmatmul.f32.gmra.mxu0 %v281
  %v493 = vpop.f32.mrf.mxu0
  %v494 = vadd.f32 %v88, %v493
  %495 = vdwg.mxu0
  %v496 = vmax.f32 %v305, 0.0
  %v497 = vmax.f32 %v308, 0.0
  %v498 = vmax.f32 %v311, 0.0
  %v499 = vmax.f32 %v314, 0.0
  %v500 = vmax.f32 %v317, 0.0
  %v501 = vmax.f32 %v320, 0.0
  %v502 = vmax.f32 %v323, 0.0
  %v503 = vmax.f32 %v326, 0.0
  %v504 = vmax.f32 %v329, 0.0
  %v505 = vmax.f32 %v332, 0.0
  %v506 = vmax.f32 %v335, 0.0
  %v507 = vmax.f32 %v338, 0.0
  %v508 = vmax.f32 %v341, 0.0
  %v509 = vmax.f32 %v344, 0.0
  %v510 = vmax.f32 %v347, 0.0
  %v511 = vmax.f32 %v350, 0.0
  %v512 = vmax.f32 %v353, 0.0
  %v513 = vmax.f32 %v356, 0.0
  %v514 = vmax.f32 %v359, 0.0
  %v515 = vmax.f32 %v362, 0.0
  %v516 = vmax.f32 %v365, 0.0
  %v517 = vmax.f32 %v368, 0.0
  %v518 = vmax.f32 %v371, 0.0
  %v519 = vmax.f32 %v374, 0.0
  %v520 = vmax.f32 %v377, 0.0
  %v521 = vmax.f32 %v380, 0.0
  %v522 = vmax.f32 %v383, 0.0
  %v523 = vmax.f32 %v386, 0.0
  %v524 = vmax.f32 %v389, 0.0
  %v525 = vmax.f32 %v392, 0.0
  %v526 = vmax.f32 %v395, 0.0
  %v527 = vmax.f32 %v398, 0.0
  %v528 = vmax.f32 %v401, 0.0
  %v529 = vmax.f32 %v404, 0.0
  %v530 = vmax.f32 %v407, 0.0
  %v531 = vmax.f32 %v410, 0.0
  %v532 = vmax.f32 %v413, 0.0
  %v533 = vmax.f32 %v416, 0.0
  %v534 = vmax.f32 %v419, 0.0
  %v535 = vmax.f32 %v422, 0.0
  %v536 = vmax.f32 %v425, 0.0
  %v537 = vmax.f32 %v428, 0.0
  %v538 = vmax.f32 %v431, 0.0
  %v539 = vmax.f32 %v434, 0.0
  %v540 = vmax.f32 %v437, 0.0
  %v541 = vmax.f32 %v440, 0.0
  %v542 = vmax.f32 %v443, 0.0
  %v543 = vmax.f32 %v446, 0.0
  %v544 = vmax.f32 %v449, 0.0
  %v545 = vmax.f32 %v452, 0.0
  %v546 = vmax.f32 %v455, 0.0
  %v547 = vmax.f32 %v458, 0.0
  %v548 = vmax.f32 %v461, 0.0
  %v549 = vmax.f32 %v464, 0.0
  %v550 = vmax.f32 %v467, 0.0
  %v551 = vmax.f32 %v470, 0.0
  %v552 = vmax.f32 %v473, 0.0
  %v553 = vmax.f32 %v476, 0.0
  %v554 = vmax.f32 %v479, 0.0
  %v555 = vmax.f32 %v482, 0.0
  %v556 = vmax.f32 %v485, 0.0
  %v557 = vmax.f32 %v488, 0.0
  %v558 = vmax.f32 %v491, 0.0
  %v559 = vmax.f32 %v494, 0.0
  %v560 = vld [vmem:[%s3] sm:$0x7]
  %v561 = vld [vmem:[%s4] sm:$0x1]
  %v563 = vperm.slane %v561, 0
  %vm565 = vcmask 23552
  %v567 = vsel %vm565, %v496, 0
  %v570 = vsel %vm565, %v497, 0
  %v573 = vsel %vm565, %v498, 0
  %v576 = vsel %vm565, %v499, 0
  %v579 = vsel %vm565, %v500, 0
  %v582 = vsel %vm565, %v501, 0
  %v585 = vsel %vm565, %v502, 0
  %v588 = vsel %vm565, %v503, 0
  %v591 = vsel %vm565, %v504, 0
  %v594 = vsel %vm565, %v505, 0
  %v597 = vsel %vm565, %v506, 0
  %v600 = vsel %vm565, %v507, 0
  %v603 = vsel %vm565, %v508, 0
  %v606 = vsel %vm565, %v509, 0
  %v609 = vsel %vm565, %v510, 0
  %v612 = vsel %vm565, %v511, 0
  %v615 = vsel %vm565, %v512, 0
  %v618 = vsel %vm565, %v513, 0
  %v621 = vsel %vm565, %v514, 0
  %v624 = vsel %vm565, %v515, 0
  %v627 = vsel %vm565, %v516, 0
  %v630 = vsel %vm565, %v517, 0
  %v633 = vsel %vm565, %v518, 0
  %v636 = vsel %vm565, %v519, 0
  %v639 = vsel %vm565, %v520, 0
  %v642 = vsel %vm565, %v521, 0
  %v645 = vsel %vm565, %v522, 0
  %v648 = vsel %vm565, %v523, 0
  %v651 = vsel %vm565, %v524, 0
  %v654 = vsel %vm565, %v525, 0
  %v657 = vsel %vm565, %v526, 0
  %v660 = vsel %vm565, %v527, 0
  %v663 = vsel %vm565, %v528, 0
  %v666 = vsel %vm565, %v529, 0
  %v669 = vsel %vm565, %v530, 0
  %v672 = vsel %vm565, %v531, 0
  %v675 = vsel %vm565, %v532, 0
  %v678 = vsel %vm565, %v533, 0
  %v681 = vsel %vm565, %v534, 0
  %v684 = vsel %vm565, %v535, 0
  %v687 = vsel %vm565, %v536, 0
  %v690 = vsel %vm565, %v537, 0
  %v693 = vsel %vm565, %v538, 0
  %v696 = vsel %vm565, %v539, 0
  %v699 = vsel %vm565, %v540, 0
  %v702 = vsel %vm565, %v541, 0
  %v705 = vsel %vm565, %v542, 0
  %v708 = vsel %vm565, %v543, 0
  %v711 = vsel %vm565, %v544, 0
  %v714 = vsel %vm565, %v545, 0
  %v717 = vsel %vm565, %v546, 0
  %v720 = vsel %vm565, %v547, 0
  %v723 = vsel %vm565, %v548, 0
  %v726 = vsel %vm565, %v549, 0
  %v729 = vsel %vm565, %v550, 0
  %v732 = vsel %vm565, %v551, 0
  %v735 = vsel %vm565, %v552, 0
  %v738 = vsel %vm565, %v553, 0
  %v741 = vsel %vm565, %v554, 0
  %v744 = vsel %vm565, %v555, 0
  %v747 = vsel %vm565, %v556, 0
  %v750 = vsel %vm565, %v557, 0
  %v753 = vsel %vm565, %v558, 0
  %v756 = vsel %vm565, %v559, 0
  %vm758 = vcmask 1042432
  %v760 = vsel %vm758, %v560, 0
  %762 = vmatpush.msra.mxu0 0.0
  %763 = vmatpush.msra.mxu0 0.0
  %764 = vmatpush.msra.mxu0 0.0
  %765 = vmatpush.msra.mxu0 0.0
  %766 = vmatpush.msra.mxu0 0.0
  %767 = vmatpush.msra.mxu0 0.0
  %768 = vmatpush.msra.mxu0 0.0
  %769 = vmatpush.msra.mxu0 0.0
  %770 = vmatpush.msra.mxu0 0.0
  %771 = vmatpush.msra.mxu0 0.0
  %772 = vmatpush.msra.mxu0 0.0
  %773 = vmatpush.msra.mxu0 0.0
  %774 = vmatpush.msra.mxu0 0.0
  %775 = vmatpush.msra.mxu0 0.0
  %776 = vmatpush.msra.mxu0 0.0
  %777 = vmatpush.msra.mxu0 %v760
  %778 = vmatmul.f32.gmra.mxu0 %v567
  %v779 = vpop.f32.mrf.mxu0
  %v780 = vadd.f32 %v563, %v779
  %781 = vmatmul.f32.gmra.mxu0 %v570
  %v782 = vpop.f32.mrf.mxu0
  %v783 = vadd.f32 %v563, %v782
  %784 = vmatmul.f32.gmra.mxu0 %v573
  %v785 = vpop.f32.mrf.mxu0
  %v786 = vadd.f32 %v563, %v785
  %787 = vmatmul.f32.gmra.mxu0 %v576
  %v788 = vpop.f32.mrf.mxu0
  %v789 = vadd.f32 %v563, %v788
  %790 = vmatmul.f32.gmra.mxu0 %v579
  %v791 = vpop.f32.mrf.mxu0
  %v792 = vadd.f32 %v563, %v791
  %793 = vmatmul.f32.gmra.mxu0 %v582
  %v794 = vpop.f32.mrf.mxu0
  %v795 = vadd.f32 %v563, %v794
  %796 = vmatmul.f32.gmra.mxu0 %v585
  %v797 = vpop.f32.mrf.mxu0
  %v798 = vadd.f32 %v563, %v797
  %799 = vmatmul.f32.gmra.mxu0 %v588
  %v800 = vpop.f32.mrf.mxu0
  %v801 = vadd.f32 %v563, %v800
  %802 = vmatmul.f32.gmra.mxu0 %v591
  %v803 = vpop.f32.mrf.mxu0
  %v804 = vadd.f32 %v563, %v803
  %805 = vmatmul.f32.gmra.mxu0 %v594
  %v806 = vpop.f32.mrf.mxu0
  %v807 = vadd.f32 %v563, %v806
  %808 = vmatmul.f32.gmra.mxu0 %v597
  %v809 = vpop.f32.mrf.mxu0
  %v810 = vadd.f32 %v563, %v809
  %811 = vmatmul.f32.gmra.mxu0 %v600
  %v812 = vpop.f32.mrf.mxu0
  %v813 = vadd.f32 %v563, %v812
  %814 = vmatmul.f32.gmra.mxu0 %v603
  %v815 = vpop.f32.mrf.mxu0
  %v816 = vadd.f32 %v563, %v815
  %817 = vmatmul.f32.gmra.mxu0 %v606
  %v818 = vpop.f32.mrf.mxu0
  %v819 = vadd.f32 %v563, %v818
  %820 = vmatmul.f32.gmra.mxu0 %v609
  %v821 = vpop.f32.mrf.mxu0
  %v822 = vadd.f32 %v563, %v821
  %823 = vmatmul.f32.gmra.mxu0 %v612
  %v824 = vpop.f32.mrf.mxu0
  %v825 = vadd.f32 %v563, %v824
  %826 = vmatmul.f32.gmra.mxu0 %v615
  %v827 = vpop.f32.mrf.mxu0
  %v828 = vadd.f32 %v563, %v827
  %829 = vmatmul.f32.gmra.mxu0 %v618
  %v830 = vpop.f32.mrf.mxu0
  %v831 = vadd.f32 %v563, %v830
  %832 = vmatmul.f32.gmra.mxu0 %v621
  %v833 = vpop.f32.mrf.mxu0
  %v834 = vadd.f32 %v563, %v833
  %835 = vmatmul.f32.gmra.mxu0 %v624
  %v836 = vpop.f32.mrf.mxu0
  %v837 = vadd.f32 %v563, %v836
  %838 = vmatmul.f32.gmra.mxu0 %v627
  %v839 = vpop.f32.mrf.mxu0
  %v840 = vadd.f32 %v563, %v839
  %841 = vmatmul.f32.gmra.mxu0 %v630
  %v842 = vpop.f32.mrf.mxu0
  %v843 = vadd.f32 %v563, %v842
  %844 = vmatmul.f32.gmra.mxu0 %v633
  %v845 = vpop.f32.mrf.mxu0
  %v846 = vadd.f32 %v563, %v845
  %847 = vmatmul.f32.gmra.mxu0 %v636
  %v848 = vpop.f32.mrf.mxu0
  %v849 = vadd.f32 %v563, %v848
  %850 = vmatmul.f32.gmra.mxu0 %v639
  %v851 = vpop.f32.mrf.mxu0
  %v852 = vadd.f32 %v563, %v851
  %853 = vmatmul.f32.gmra.mxu0 %v642
  %v854 = vpop.f32.mrf.mxu0
  %v855 = vadd.f32 %v563, %v854
  %856 = vmatmul.f32.gmra.mxu0 %v645
  %v857 = vpop.f32.mrf.mxu0
  %v858 = vadd.f32 %v563, %v857
  %859 = vmatmul.f32.gmra.mxu0 %v648
  %v860 = vpop.f32.mrf.mxu0
  %v861 = vadd.f32 %v563, %v860
  %862 = vmatmul.f32.gmra.mxu0 %v651
  %v863 = vpop.f32.mrf.mxu0
  %v864 = vadd.f32 %v563, %v863
  %865 = vmatmul.f32.gmra.mxu0 %v654
  %v866 = vpop.f32.mrf.mxu0
  %v867 = vadd.f32 %v563, %v866
  %868 = vmatmul.f32.gmra.mxu0 %v657
  %v869 = vpop.f32.mrf.mxu0
  %v870 = vadd.f32 %v563, %v869
  %871 = vmatmul.f32.gmra.mxu0 %v660
  %v872 = vpop.f32.mrf.mxu0
  %v873 = vadd.f32 %v563, %v872
  %874 = vmatmul.f32.gmra.mxu0 %v663
  %v875 = vpop.f32.mrf.mxu0
  %v876 = vadd.f32 %v563, %v875
  %877 = vmatmul.f32.gmra.mxu0 %v666
  %v878 = vpop.f32.mrf.mxu0
  %v879 = vadd.f32 %v563, %v878
  %880 = vmatmul.f32.gmra.mxu0 %v669
  %v881 = vpop.f32.mrf.mxu0
  %v882 = vadd.f32 %v563, %v881
  %883 = vmatmul.f32.gmra.mxu0 %v672
  %v884 = vpop.f32.mrf.mxu0
  %v885 = vadd.f32 %v563, %v884
  %886 = vmatmul.f32.gmra.mxu0 %v675
  %v887 = vpop.f32.mrf.mxu0
  %v888 = vadd.f32 %v563, %v887
  %889 = vmatmul.f32.gmra.mxu0 %v678
  %v890 = vpop.f32.mrf.mxu0
  %v891 = vadd.f32 %v563, %v890
  %892 = vmatmul.f32.gmra.mxu0 %v681
  %v893 = vpop.f32.mrf.mxu0
  %v894 = vadd.f32 %v563, %v893
  %895 = vmatmul.f32.gmra.mxu0 %v684
  %v896 = vpop.f32.mrf.mxu0
  %v897 = vadd.f32 %v563, %v896
  %898 = vmatmul.f32.gmra.mxu0 %v687
  %v899 = vpop.f32.mrf.mxu0
  %v900 = vadd.f32 %v563, %v899
  %901 = vmatmul.f32.gmra.mxu0 %v690
  %v902 = vpop.f32.mrf.mxu0
  %v903 = vadd.f32 %v563, %v902
  %904 = vmatmul.f32.gmra.mxu0 %v693
  %v905 = vpop.f32.mrf.mxu0
  %v906 = vadd.f32 %v563, %v905
  %907 = vmatmul.f32.gmra.mxu0 %v696
  %v908 = vpop.f32.mrf.mxu0
  %v909 = vadd.f32 %v563, %v908
  %910 = vmatmul.f32.gmra.mxu0 %v699
  %v911 = vpop.f32.mrf.mxu0
  %v912 = vadd.f32 %v563, %v911
  %913 = vmatmul.f32.gmra.mxu0 %v702
  %v914 = vpop.f32.mrf.mxu0
  %v915 = vadd.f32 %v563, %v914
  %916 = vmatmul.f32.gmra.mxu0 %v705
  %v917 = vpop.f32.mrf.mxu0
  %v918 = vadd.f32 %v563, %v917
  %919 = vmatmul.f32.gmra.mxu0 %v708
  %v920 = vpop.f32.mrf.mxu0
  %v921 = vadd.f32 %v563, %v920
  %922 = vmatmul.f32.gmra.mxu0 %v711
  %v923 = vpop.f32.mrf.mxu0
  %v924 = vadd.f32 %v563, %v923
  %925 = vmatmul.f32.gmra.mxu0 %v714
  %v926 = vpop.f32.mrf.mxu0
  %v927 = vadd.f32 %v563, %v926
  %928 = vmatmul.f32.gmra.mxu0 %v717
  %v929 = vpop.f32.mrf.mxu0
  %v930 = vadd.f32 %v563, %v929
  %931 = vmatmul.f32.gmra.mxu0 %v720
  %v932 = vpop.f32.mrf.mxu0
  %v933 = vadd.f32 %v563, %v932
  %934 = vmatmul.f32.gmra.mxu0 %v723
  %v935 = vpop.f32.mrf.mxu0
  %v936 = vadd.f32 %v563, %v935
  %937 = vmatmul.f32.gmra.mxu0 %v726
  %v938 = vpop.f32.mrf.mxu0
  %v939 = vadd.f32 %v563, %v938
  %940 = vmatmul.f32.gmra.mxu0 %v729
  %v941 = vpop.f32.mrf.mxu0
  %v942 = vadd.f32 %v563, %v941
  %943 = vmatmul.f32.gmra.mxu0 %v732
  %v944 = vpop.f32.mrf.mxu0
  %v945 = vadd.f32 %v563, %v944
  %946 = vmatmul.f32.gmra.mxu0 %v735
  %v947 = vpop.f32.mrf.mxu0
  %v948 = vadd.f32 %v563, %v947
  %949 = vmatmul.f32.gmra.mxu0 %v738
  %v950 = vpop.f32.mrf.mxu0
  %v951 = vadd.f32 %v563, %v950
  %952 = vmatmul.f32.gmra.mxu0 %v741
  %v953 = vpop.f32.mrf.mxu0
  %v954 = vadd.f32 %v563, %v953
  %955 = vmatmul.f32.gmra.mxu0 %v744
  %v956 = vpop.f32.mrf.mxu0
  %v957 = vadd.f32 %v563, %v956
  %958 = vmatmul.f32.gmra.mxu0 %v747
  %v959 = vpop.f32.mrf.mxu0
  %v960 = vadd.f32 %v563, %v959
  %961 = vmatmul.f32.gmra.mxu0 %v750
  %v962 = vpop.f32.mrf.mxu0
  %v963 = vadd.f32 %v563, %v962
  %964 = vmatmul.f32.gmra.mxu0 %v753
  %v965 = vpop.f32.mrf.mxu0
  %v966 = vadd.f32 %v563, %v965
  %967 = vmatmul.f32.gmra.mxu0 %v756
  %v968 = vpop.f32.mrf.mxu0
  %v969 = vadd.f32 %v563, %v968
  %970 = vdwg.mxu0
  %v971 = vxor.u32 %v780, 2147483648
  %v972 = vxor.u32 %v783, 2147483648
  %v973 = vxor.u32 %v786, 2147483648
  %v974 = vxor.u32 %v789, 2147483648
  %v975 = vxor.u32 %v792, 2147483648
  %v976 = vxor.u32 %v795, 2147483648
  %v977 = vxor.u32 %v798, 2147483648
  %v978 = vxor.u32 %v801, 2147483648
  %v979 = vxor.u32 %v804, 2147483648
  %v980 = vxor.u32 %v807, 2147483648
  %v981 = vxor.u32 %v810, 2147483648
  %v982 = vxor.u32 %v813, 2147483648
  %v983 = vxor.u32 %v816, 2147483648
  %v984 = vxor.u32 %v819, 2147483648
  %v985 = vxor.u32 %v822, 2147483648
  %v986 = vxor.u32 %v825, 2147483648
  %v987 = vxor.u32 %v828, 2147483648
  %v988 = vxor.u32 %v831, 2147483648
  %v989 = vxor.u32 %v834, 2147483648
  %v990 = vxor.u32 %v837, 2147483648
  %v991 = vxor.u32 %v840, 2147483648
  %v992 = vxor.u32 %v843, 2147483648
  %v993 = vxor.u32 %v846, 2147483648
  %v994 = vxor.u32 %v849, 2147483648
  %v995 = vxor.u32 %v852, 2147483648
  %v996 = vxor.u32 %v855, 2147483648
  %v997 = vxor.u32 %v858, 2147483648
  %v998 = vxor.u32 %v861, 2147483648
  %v999 = vxor.u32 %v864, 2147483648
  %v1000 = vxor.u32 %v867, 2147483648
  %v1001 = vxor.u32 %v870, 2147483648
  %v1002 = vxor.u32 %v873, 2147483648
  %v1003 = vxor.u32 %v876, 2147483648
  %v1004 = vxor.u32 %v879, 2147483648
  %v1005 = vxor.u32 %v882, 2147483648
  %v1006 = vxor.u32 %v885, 2147483648
  %v1007 = vxor.u32 %v888, 2147483648
  %v1008 = vxor.u32 %v891, 2147483648
  %v1009 = vxor.u32 %v894, 2147483648
  %v1010 = vxor.u32 %v897, 2147483648
  %v1011 = vxor.u32 %v900, 2147483648
  %v1012 = vxor.u32 %v903, 2147483648
  %v1013 = vxor.u32 %v906, 2147483648
  %v1014 = vxor.u32 %v909, 2147483648
  %v1015 = vxor.u32 %v912, 2147483648
  %v1016 = vxor.u32 %v915, 2147483648
  %v1017 = vxor.u32 %v918, 2147483648
  %v1018 = vxor.u32 %v921, 2147483648
  %v1019 = vxor.u32 %v924, 2147483648
  %v1020 = vxor.u32 %v927, 2147483648
  %v1021 = vxor.u32 %v930, 2147483648
  %v1022 = vxor.u32 %v933, 2147483648
  %v1023 = vxor.u32 %v936, 2147483648
  %v1024 = vxor.u32 %v939, 2147483648
  %v1025 = vxor.u32 %v942, 2147483648
  %v1026 = vxor.u32 %v945, 2147483648
  %v1027 = vxor.u32 %v948, 2147483648
  %v1028 = vxor.u32 %v951, 2147483648
  %v1029 = vxor.u32 %v954, 2147483648
  %v1030 = vxor.u32 %v957, 2147483648
  %v1031 = vxor.u32 %v960, 2147483648
  %v1032 = vxor.u32 %v963, 2147483648
  %v1033 = vxor.u32 %v966, 2147483648
  %v1034 = vxor.u32 %v969, 2147483648
  %v1035 = vmul.f32 %v971, 1.442695
  %v1036 = vpow.pop %v1035
  %v1037 = vmul.f32 %v972, 1.442695
  %v1038 = vpow.pop %v1037
  %v1039 = vmul.f32 %v973, 1.442695
  %v1040 = vpow.pop %v1039
  %v1041 = vmul.f32 %v974, 1.442695
  %v1042 = vpow.pop %v1041
  %v1043 = vmul.f32 %v975, 1.442695
  %v1044 = vpow.pop %v1043
  %v1045 = vmul.f32 %v976, 1.442695
  %v1046 = vpow.pop %v1045
  %v1047 = vmul.f32 %v977, 1.442695
  %v1048 = vpow.pop %v1047
  %v1049 = vmul.f32 %v978, 1.442695
  %v1050 = vpow.pop %v1049
  %v1051 = vmul.f32 %v979, 1.442695
  %v1052 = vpow.pop %v1051
  %v1053 = vmul.f32 %v980, 1.442695
  %v1054 = vpow.pop %v1053
  %v1055 = vmul.f32 %v981, 1.442695
  %v1056 = vpow.pop %v1055
  %v1057 = vmul.f32 %v982, 1.442695
  %v1058 = vpow.pop %v1057
  %v1059 = vmul.f32 %v983, 1.442695
  %v1060 = vpow.pop %v1059
  %v1061 = vmul.f32 %v984, 1.442695
  %v1062 = vpow.pop %v1061
  %v1063 = vmul.f32 %v985, 1.442695
  %v1064 = vpow.pop %v1063
  %v1065 = vmul.f32 %v986, 1.442695
  %v1066 = vpow.pop %v1065
  %v1067 = vmul.f32 %v987, 1.442695
  %v1068 = vpow.pop %v1067
  %v1069 = vmul.f32 %v988, 1.442695
  %v1070 = vpow.pop %v1069
  %v1071 = vmul.f32 %v989, 1.442695
  %v1072 = vpow.pop %v1071
  %v1073 = vmul.f32 %v990, 1.442695
  %v1074 = vpow.pop %v1073
  %v1075 = vmul.f32 %v991, 1.442695
  %v1076 = vpow.pop %v1075
  %v1077 = vmul.f32 %v992, 1.442695
  %v1078 = vpow.pop %v1077
  %v1079 = vmul.f32 %v993, 1.442695
  %v1080 = vpow.pop %v1079
  %v1081 = vmul.f32 %v994, 1.442695
  %v1082 = vpow.pop %v1081
  %v1083 = vmul.f32 %v995, 1.442695
  %v1084 = vpow.pop %v1083
  %v1085 = vmul.f32 %v996, 1.442695
  %v1086 = vpow.pop %v1085
  %v1087 = vmul.f32 %v997, 1.442695
  %v1088 = vpow.pop %v1087
  %v1089 = vmul.f32 %v998, 1.442695
  %v1090 = vpow.pop %v1089
  %v1091 = vmul.f32 %v999, 1.442695
  %v1092 = vpow.pop %v1091
  %v1093 = vmul.f32 %v1000, 1.442695
  %v1094 = vpow.pop %v1093
  %v1095 = vmul.f32 %v1001, 1.442695
  %v1096 = vpow.pop %v1095
  %v1097 = vmul.f32 %v1002, 1.442695
  %v1098 = vpow.pop %v1097
  %v1099 = vmul.f32 %v1003, 1.442695
  %v1100 = vpow.pop %v1099
  %v1101 = vmul.f32 %v1004, 1.442695
  %v1102 = vpow.pop %v1101
  %v1103 = vmul.f32 %v1005, 1.442695
  %v1104 = vpow.pop %v1103
  %v1105 = vmul.f32 %v1006, 1.442695
  %v1106 = vpow.pop %v1105
  %v1107 = vmul.f32 %v1007, 1.442695
  %v1108 = vpow.pop %v1107
  %v1109 = vmul.f32 %v1008, 1.442695
  %v1110 = vpow.pop %v1109
  %v1111 = vmul.f32 %v1009, 1.442695
  %v1112 = vpow.pop %v1111
  %v1113 = vmul.f32 %v1010, 1.442695
  %v1114 = vpow.pop %v1113
  %v1115 = vmul.f32 %v1011, 1.442695
  %v1116 = vpow.pop %v1115
  %v1117 = vmul.f32 %v1012, 1.442695
  %v1118 = vpow.pop %v1117
  %v1119 = vmul.f32 %v1013, 1.442695
  %v1120 = vpow.pop %v1119
  %v1121 = vmul.f32 %v1014, 1.442695
  %v1122 = vpow.pop %v1121
  %v1123 = vmul.f32 %v1015, 1.442695
  %v1124 = vpow.pop %v1123
  %v1125 = vmul.f32 %v1016, 1.442695
  %v1126 = vpow.pop %v1125
  %v1127 = vmul.f32 %v1017, 1.442695
  %v1128 = vpow.pop %v1127
  %v1129 = vmul.f32 %v1018, 1.442695
  %v1130 = vpow.pop %v1129
  %v1131 = vmul.f32 %v1019, 1.442695
  %v1132 = vpow.pop %v1131
  %v1133 = vmul.f32 %v1020, 1.442695
  %v1134 = vpow.pop %v1133
  %v1135 = vmul.f32 %v1021, 1.442695
  %v1136 = vpow.pop %v1135
  %v1137 = vmul.f32 %v1022, 1.442695
  %v1138 = vpow.pop %v1137
  %v1139 = vmul.f32 %v1023, 1.442695
  %v1140 = vpow.pop %v1139
  %v1141 = vmul.f32 %v1024, 1.442695
  %v1142 = vpow.pop %v1141
  %v1143 = vmul.f32 %v1025, 1.442695
  %v1144 = vpow.pop %v1143
  %v1145 = vmul.f32 %v1026, 1.442695
  %v1146 = vpow.pop %v1145
  %v1147 = vmul.f32 %v1027, 1.442695
  %v1148 = vpow.pop %v1147
  %v1149 = vmul.f32 %v1028, 1.442695
  %v1150 = vpow.pop %v1149
  %v1151 = vmul.f32 %v1029, 1.442695
  %v1152 = vpow.pop %v1151
  %v1153 = vmul.f32 %v1030, 1.442695
  %v1154 = vpow.pop %v1153
  %v1155 = vmul.f32 %v1031, 1.442695
  %v1156 = vpow.pop %v1155
  %v1157 = vmul.f32 %v1032, 1.442695
  %v1158 = vpow.pop %v1157
  %v1159 = vmul.f32 %v1033, 1.442695
  %v1160 = vpow.pop %v1159
  %v1161 = vmul.f32 %v1034, 1.442695
  %v1162 = vpow.pop %v1161
  %v1163 = vadd.f32 %v1036, 1.0
  %v1164 = vadd.f32 %v1038, 1.0
  %v1165 = vadd.f32 %v1040, 1.0
  %v1166 = vadd.f32 %v1042, 1.0
  %v1167 = vadd.f32 %v1044, 1.0
  %v1168 = vadd.f32 %v1046, 1.0
  %v1169 = vadd.f32 %v1048, 1.0
  %v1170 = vadd.f32 %v1050, 1.0
  %v1171 = vadd.f32 %v1052, 1.0
  %v1172 = vadd.f32 %v1054, 1.0
  %v1173 = vadd.f32 %v1056, 1.0
  %v1174 = vadd.f32 %v1058, 1.0
  %v1175 = vadd.f32 %v1060, 1.0
  %v1176 = vadd.f32 %v1062, 1.0
  %v1177 = vadd.f32 %v1064, 1.0
  %v1178 = vadd.f32 %v1066, 1.0
  %v1179 = vadd.f32 %v1068, 1.0
  %v1180 = vadd.f32 %v1070, 1.0
  %v1181 = vadd.f32 %v1072, 1.0
  %v1182 = vadd.f32 %v1074, 1.0
  %v1183 = vadd.f32 %v1076, 1.0
  %v1184 = vadd.f32 %v1078, 1.0
  %v1185 = vadd.f32 %v1080, 1.0
  %v1186 = vadd.f32 %v1082, 1.0
  %v1187 = vadd.f32 %v1084, 1.0
  %v1188 = vadd.f32 %v1086, 1.0
  %v1189 = vadd.f32 %v1088, 1.0
  %v1190 = vadd.f32 %v1090, 1.0
  %v1191 = vadd.f32 %v1092, 1.0
  %v1192 = vadd.f32 %v1094, 1.0
  %v1193 = vadd.f32 %v1096, 1.0
  %v1194 = vadd.f32 %v1098, 1.0
  %v1195 = vadd.f32 %v1100, 1.0
  %v1196 = vadd.f32 %v1102, 1.0
  %v1197 = vadd.f32 %v1104, 1.0
  %v1198 = vadd.f32 %v1106, 1.0
  %v1199 = vadd.f32 %v1108, 1.0
  %v1200 = vadd.f32 %v1110, 1.0
  %v1201 = vadd.f32 %v1112, 1.0
  %v1202 = vadd.f32 %v1114, 1.0
  %v1203 = vadd.f32 %v1116, 1.0
  %v1204 = vadd.f32 %v1118, 1.0
  %v1205 = vadd.f32 %v1120, 1.0
  %v1206 = vadd.f32 %v1122, 1.0
  %v1207 = vadd.f32 %v1124, 1.0
  %v1208 = vadd.f32 %v1126, 1.0
  %v1209 = vadd.f32 %v1128, 1.0
  %v1210 = vadd.f32 %v1130, 1.0
  %v1211 = vadd.f32 %v1132, 1.0
  %v1212 = vadd.f32 %v1134, 1.0
  %v1213 = vadd.f32 %v1136, 1.0
  %v1214 = vadd.f32 %v1138, 1.0
  %v1215 = vadd.f32 %v1140, 1.0
  %v1216 = vadd.f32 %v1142, 1.0
  %v1217 = vadd.f32 %v1144, 1.0
  %v1218 = vadd.f32 %v1146, 1.0
  %v1219 = vadd.f32 %v1148, 1.0
  %v1220 = vadd.f32 %v1150, 1.0
  %v1221 = vadd.f32 %v1152, 1.0
  %v1222 = vadd.f32 %v1154, 1.0
  %v1223 = vadd.f32 %v1156, 1.0
  %v1224 = vadd.f32 %v1158, 1.0
  %v1225 = vadd.f32 %v1160, 1.0
  %v1226 = vadd.f32 %v1162, 1.0
  %v1227 = vrcp.pop %v1163
  %v1228 = vmul.f32 %v1163, %v1227
  %v1229 = vsub.f32 1.0, %v1228
  %v1230 = vmul.f32 %v1227, %v1229
  %v1231 = vadd.f32 %v1227, %v1230
  %vm1232 = vweird.f32 %v1163
  %vm1233 = vweird.f32 %v1227
  %vm1234 = vmor %vm1232, %vm1233
  %v1235 = vsel %vm1234, %v1227, %v1231
  %v1236 = vand.u32 2147483647, %v1163
  %vm1237 = vcmp.eq.f32.partialorder %v1236, 8.507059e+37
  %v1238 = vand.u32 %v1163, 2147483648
  %v1239 = vor.u32 1.1754944e-38, %v1238
  %v1240 = vsel %vm1237, %v1239, %v1235
  %v1241 = vmul.f32 1.0, %v1240
  %v1242 = vrcp.pop %v1164
  %v1243 = vmul.f32 %v1164, %v1242
  %v1244 = vsub.f32 1.0, %v1243
  %v1245 = vmul.f32 %v1242, %v1244
  %v1246 = vadd.f32 %v1242, %v1245
  %vm1247 = vweird.f32 %v1164
  %vm1248 = vweird.f32 %v1242
  %vm1249 = vmor %vm1247, %vm1248
  %v1250 = vsel %vm1249, %v1242, %v1246
  %v1251 = vand.u32 2147483647, %v1164
  %vm1252 = vcmp.eq.f32.partialorder %v1251, 8.507059e+37
  %v1253 = vand.u32 %v1164, 2147483648
  %v1254 = vor.u32 1.1754944e-38, %v1253
  %v1255 = vsel %vm1252, %v1254, %v1250
  %v1256 = vmul.f32 1.0, %v1255
  %v1257 = vrcp.pop %v1165
  %v1258 = vmul.f32 %v1165, %v1257
  %v1259 = vsub.f32 1.0, %v1258
  %v1260 = vmul.f32 %v1257, %v1259
  %v1261 = vadd.f32 %v1257, %v1260
  %vm1262 = vweird.f32 %v1165
  %vm1263 = vweird.f32 %v1257
  %vm1264 = vmor %vm1262, %vm1263
  %v1265 = vsel %vm1264, %v1257, %v1261
  %v1266 = vand.u32 2147483647, %v1165
  %vm1267 = vcmp.eq.f32.partialorder %v1266, 8.507059e+37
  %v1268 = vand.u32 %v1165, 2147483648
  %v1269 = vor.u32 1.1754944e-38, %v1268
  %v1270 = vsel %vm1267, %v1269, %v1265
  %v1271 = vmul.f32 1.0, %v1270
  %v1272 = vrcp.pop %v1166
  %v1273 = vmul.f32 %v1166, %v1272
  %v1274 = vsub.f32 1.0, %v1273
  %v1275 = vmul.f32 %v1272, %v1274
  %v1276 = vadd.f32 %v1272, %v1275
  %vm1277 = vweird.f32 %v1166
  %vm1278 = vweird.f32 %v1272
  %vm1279 = vmor %vm1277, %vm1278
  %v1280 = vsel %vm1279, %v1272, %v1276
  %v1281 = vand.u32 2147483647, %v1166
  %vm1282 = vcmp.eq.f32.partialorder %v1281, 8.507059e+37
  %v1283 = vand.u32 %v1166, 2147483648
  %v1284 = vor.u32 1.1754944e-38, %v1283
  %v1285 = vsel %vm1282, %v1284, %v1280
  %v1286 = vmul.f32 1.0, %v1285
  %v1287 = vrcp.pop %v1167
  %v1288 = vmul.f32 %v1167, %v1287
  %v1289 = vsub.f32 1.0, %v1288
  %v1290 = vmul.f32 %v1287, %v1289
  %v1291 = vadd.f32 %v1287, %v1290
  %vm1292 = vweird.f32 %v1167
  %vm1293 = vweird.f32 %v1287
  %vm1294 = vmor %vm1292, %vm1293
  %v1295 = vsel %vm1294, %v1287, %v1291
  %v1296 = vand.u32 2147483647, %v1167
  %vm1297 = vcmp.eq.f32.partialorder %v1296, 8.507059e+37
  %v1298 = vand.u32 %v1167, 2147483648
  %v1299 = vor.u32 1.1754944e-38, %v1298
  %v1300 = vsel %vm1297, %v1299, %v1295
  %v1301 = vmul.f32 1.0, %v1300
  %v1302 = vrcp.pop %v1168
  %v1303 = vmul.f32 %v1168, %v1302
  %v1304 = vsub.f32 1.0, %v1303
  %v1305 = vmul.f32 %v1302, %v1304
  %v1306 = vadd.f32 %v1302, %v1305
  %vm1307 = vweird.f32 %v1168
  %vm1308 = vweird.f32 %v1302
  %vm1309 = vmor %vm1307, %vm1308
  %v1310 = vsel %vm1309, %v1302, %v1306
  %v1311 = vand.u32 2147483647, %v1168
  %vm1312 = vcmp.eq.f32.partialorder %v1311, 8.507059e+37
  %v1313 = vand.u32 %v1168, 2147483648
  %v1314 = vor.u32 1.1754944e-38, %v1313
  %v1315 = vsel %vm1312, %v1314, %v1310
  %v1316 = vmul.f32 1.0, %v1315
  %v1317 = vrcp.pop %v1169
  %v1318 = vmul.f32 %v1169, %v1317
  %v1319 = vsub.f32 1.0, %v1318
  %v1320 = vmul.f32 %v1317, %v1319
  %v1321 = vadd.f32 %v1317, %v1320
  %vm1322 = vweird.f32 %v1169
  %vm1323 = vweird.f32 %v1317
  %vm1324 = vmor %vm1322, %vm1323
  %v1325 = vsel %vm1324, %v1317, %v1321
  %v1326 = vand.u32 2147483647, %v1169
  %vm1327 = vcmp.eq.f32.partialorder %v1326, 8.507059e+37
  %v1328 = vand.u32 %v1169, 2147483648
  %v1329 = vor.u32 1.1754944e-38, %v1328
  %v1330 = vsel %vm1327, %v1329, %v1325
  %v1331 = vmul.f32 1.0, %v1330
  %v1332 = vrcp.pop %v1170
  %v1333 = vmul.f32 %v1170, %v1332
  %v1334 = vsub.f32 1.0, %v1333
  %v1335 = vmul.f32 %v1332, %v1334
  %v1336 = vadd.f32 %v1332, %v1335
  %vm1337 = vweird.f32 %v1170
  %vm1338 = vweird.f32 %v1332
  %vm1339 = vmor %vm1337, %vm1338
  %v1340 = vsel %vm1339, %v1332, %v1336
  %v1341 = vand.u32 2147483647, %v1170
  %vm1342 = vcmp.eq.f32.partialorder %v1341, 8.507059e+37
  %v1343 = vand.u32 %v1170, 2147483648
  %v1344 = vor.u32 1.1754944e-38, %v1343
  %v1345 = vsel %vm1342, %v1344, %v1340
  %v1346 = vmul.f32 1.0, %v1345
  %v1347 = vrcp.pop %v1171
  %v1348 = vmul.f32 %v1171, %v1347
  %v1349 = vsub.f32 1.0, %v1348
  %v1350 = vmul.f32 %v1347, %v1349
  %v1351 = vadd.f32 %v1347, %v1350
  %vm1352 = vweird.f32 %v1171
  %vm1353 = vweird.f32 %v1347
  %vm1354 = vmor %vm1352, %vm1353
  %v1355 = vsel %vm1354, %v1347, %v1351
  %v1356 = vand.u32 2147483647, %v1171
  %vm1357 = vcmp.eq.f32.partialorder %v1356, 8.507059e+37
  %v1358 = vand.u32 %v1171, 2147483648
  %v1359 = vor.u32 1.1754944e-38, %v1358
  %v1360 = vsel %vm1357, %v1359, %v1355
  %v1361 = vmul.f32 1.0, %v1360
  %v1362 = vrcp.pop %v1172
  %v1363 = vmul.f32 %v1172, %v1362
  %v1364 = vsub.f32 1.0, %v1363
  %v1365 = vmul.f32 %v1362, %v1364
  %v1366 = vadd.f32 %v1362, %v1365
  %vm1367 = vweird.f32 %v1172
  %vm1368 = vweird.f32 %v1362
  %vm1369 = vmor %vm1367, %vm1368
  %v1370 = vsel %vm1369, %v1362, %v1366
  %v1371 = vand.u32 2147483647, %v1172
  %vm1372 = vcmp.eq.f32.partialorder %v1371, 8.507059e+37
  %v1373 = vand.u32 %v1172, 2147483648
  %v1374 = vor.u32 1.1754944e-38, %v1373
  %v1375 = vsel %vm1372, %v1374, %v1370
  %v1376 = vmul.f32 1.0, %v1375
  %v1377 = vrcp.pop %v1173
  %v1378 = vmul.f32 %v1173, %v1377
  %v1379 = vsub.f32 1.0, %v1378
  %v1380 = vmul.f32 %v1377, %v1379
  %v1381 = vadd.f32 %v1377, %v1380
  %vm1382 = vweird.f32 %v1173
  %vm1383 = vweird.f32 %v1377
  %vm1384 = vmor %vm1382, %vm1383
  %v1385 = vsel %vm1384, %v1377, %v1381
  %v1386 = vand.u32 2147483647, %v1173
  %vm1387 = vcmp.eq.f32.partialorder %v1386, 8.507059e+37
  %v1388 = vand.u32 %v1173, 2147483648
  %v1389 = vor.u32 1.1754944e-38, %v1388
  %v1390 = vsel %vm1387, %v1389, %v1385
  %v1391 = vmul.f32 1.0, %v1390
  %v1392 = vrcp.pop %v1174
  %v1393 = vmul.f32 %v1174, %v1392
  %v1394 = vsub.f32 1.0, %v1393
  %v1395 = vmul.f32 %v1392, %v1394
  %v1396 = vadd.f32 %v1392, %v1395
  %vm1397 = vweird.f32 %v1174
  %vm1398 = vweird.f32 %v1392
  %vm1399 = vmor %vm1397, %vm1398
  %v1400 = vsel %vm1399, %v1392, %v1396
  %v1401 = vand.u32 2147483647, %v1174
  %vm1402 = vcmp.eq.f32.partialorder %v1401, 8.507059e+37
  %v1403 = vand.u32 %v1174, 2147483648
  %v1404 = vor.u32 1.1754944e-38, %v1403
  %v1405 = vsel %vm1402, %v1404, %v1400
  %v1406 = vmul.f32 1.0, %v1405
  %v1407 = vrcp.pop %v1175
  %v1408 = vmul.f32 %v1175, %v1407
  %v1409 = vsub.f32 1.0, %v1408
  %v1410 = vmul.f32 %v1407, %v1409
  %v1411 = vadd.f32 %v1407, %v1410
  %vm1412 = vweird.f32 %v1175
  %vm1413 = vweird.f32 %v1407
  %vm1414 = vmor %vm1412, %vm1413
  %v1415 = vsel %vm1414, %v1407, %v1411
  %v1416 = vand.u32 2147483647, %v1175
  %vm1417 = vcmp.eq.f32.partialorder %v1416, 8.507059e+37
  %v1418 = vand.u32 %v1175, 2147483648
  %v1419 = vor.u32 1.1754944e-38, %v1418
  %v1420 = vsel %vm1417, %v1419, %v1415
  %v1421 = vmul.f32 1.0, %v1420
  %v1422 = vrcp.pop %v1176
  %v1423 = vmul.f32 %v1176, %v1422
  %v1424 = vsub.f32 1.0, %v1423
  %v1425 = vmul.f32 %v1422, %v1424
  %v1426 = vadd.f32 %v1422, %v1425
  %vm1427 = vweird.f32 %v1176
  %vm1428 = vweird.f32 %v1422
  %vm1429 = vmor %vm1427, %vm1428
  %v1430 = vsel %vm1429, %v1422, %v1426
  %v1431 = vand.u32 2147483647, %v1176
  %vm1432 = vcmp.eq.f32.partialorder %v1431, 8.507059e+37
  %v1433 = vand.u32 %v1176, 2147483648
  %v1434 = vor.u32 1.1754944e-38, %v1433
  %v1435 = vsel %vm1432, %v1434, %v1430
  %v1436 = vmul.f32 1.0, %v1435
  %v1437 = vrcp.pop %v1177
  %v1438 = vmul.f32 %v1177, %v1437
  %v1439 = vsub.f32 1.0, %v1438
  %v1440 = vmul.f32 %v1437, %v1439
  %v1441 = vadd.f32 %v1437, %v1440
  %vm1442 = vweird.f32 %v1177
  %vm1443 = vweird.f32 %v1437
  %vm1444 = vmor %vm1442, %vm1443
  %v1445 = vsel %vm1444, %v1437, %v1441
  %v1446 = vand.u32 2147483647, %v1177
  %vm1447 = vcmp.eq.f32.partialorder %v1446, 8.507059e+37
  %v1448 = vand.u32 %v1177, 2147483648
  %v1449 = vor.u32 1.1754944e-38, %v1448
  %v1450 = vsel %vm1447, %v1449, %v1445
  %v1451 = vmul.f32 1.0, %v1450
  %v1452 = vrcp.pop %v1178
  %v1453 = vmul.f32 %v1178, %v1452
  %v1454 = vsub.f32 1.0, %v1453
  %v1455 = vmul.f32 %v1452, %v1454
  %v1456 = vadd.f32 %v1452, %v1455
  %vm1457 = vweird.f32 %v1178
  %vm1458 = vweird.f32 %v1452
  %vm1459 = vmor %vm1457, %vm1458
  %v1460 = vsel %vm1459, %v1452, %v1456
  %v1461 = vand.u32 2147483647, %v1178
  %vm1462 = vcmp.eq.f32.partialorder %v1461, 8.507059e+37
  %v1463 = vand.u32 %v1178, 2147483648
  %v1464 = vor.u32 1.1754944e-38, %v1463
  %v1465 = vsel %vm1462, %v1464, %v1460
  %v1466 = vmul.f32 1.0, %v1465
  %v1467 = vrcp.pop %v1179
  %v1468 = vmul.f32 %v1179, %v1467
  %v1469 = vsub.f32 1.0, %v1468
  %v1470 = vmul.f32 %v1467, %v1469
  %v1471 = vadd.f32 %v1467, %v1470
  %vm1472 = vweird.f32 %v1179
  %vm1473 = vweird.f32 %v1467
  %vm1474 = vmor %vm1472, %vm1473
  %v1475 = vsel %vm1474, %v1467, %v1471
  %v1476 = vand.u32 2147483647, %v1179
  %vm1477 = vcmp.eq.f32.partialorder %v1476, 8.507059e+37
  %v1478 = vand.u32 %v1179, 2147483648
  %v1479 = vor.u32 1.1754944e-38, %v1478
  %v1480 = vsel %vm1477, %v1479, %v1475
  %v1481 = vmul.f32 1.0, %v1480
  %v1482 = vrcp.pop %v1180
  %v1483 = vmul.f32 %v1180, %v1482
  %v1484 = vsub.f32 1.0, %v1483
  %v1485 = vmul.f32 %v1482, %v1484
  %v1486 = vadd.f32 %v1482, %v1485
  %vm1487 = vweird.f32 %v1180
  %vm1488 = vweird.f32 %v1482
  %vm1489 = vmor %vm1487, %vm1488
  %v1490 = vsel %vm1489, %v1482, %v1486
  %v1491 = vand.u32 2147483647, %v1180
  %vm1492 = vcmp.eq.f32.partialorder %v1491, 8.507059e+37
  %v1493 = vand.u32 %v1180, 2147483648
  %v1494 = vor.u32 1.1754944e-38, %v1493
  %v1495 = vsel %vm1492, %v1494, %v1490
  %v1496 = vmul.f32 1.0, %v1495
  %v1497 = vrcp.pop %v1181
  %v1498 = vmul.f32 %v1181, %v1497
  %v1499 = vsub.f32 1.0, %v1498
  %v1500 = vmul.f32 %v1497, %v1499
  %v1501 = vadd.f32 %v1497, %v1500
  %vm1502 = vweird.f32 %v1181
  %vm1503 = vweird.f32 %v1497
  %vm1504 = vmor %vm1502, %vm1503
  %v1505 = vsel %vm1504, %v1497, %v1501
  %v1506 = vand.u32 2147483647, %v1181
  %vm1507 = vcmp.eq.f32.partialorder %v1506, 8.507059e+37
  %v1508 = vand.u32 %v1181, 2147483648
  %v1509 = vor.u32 1.1754944e-38, %v1508
  %v1510 = vsel %vm1507, %v1509, %v1505
  %v1511 = vmul.f32 1.0, %v1510
  %v1512 = vrcp.pop %v1182
  %v1513 = vmul.f32 %v1182, %v1512
  %v1514 = vsub.f32 1.0, %v1513
  %v1515 = vmul.f32 %v1512, %v1514
  %v1516 = vadd.f32 %v1512, %v1515
  %vm1517 = vweird.f32 %v1182
  %vm1518 = vweird.f32 %v1512
  %vm1519 = vmor %vm1517, %vm1518
  %v1520 = vsel %vm1519, %v1512, %v1516
  %v1521 = vand.u32 2147483647, %v1182
  %vm1522 = vcmp.eq.f32.partialorder %v1521, 8.507059e+37
  %v1523 = vand.u32 %v1182, 2147483648
  %v1524 = vor.u32 1.1754944e-38, %v1523
  %v1525 = vsel %vm1522, %v1524, %v1520
  %v1526 = vmul.f32 1.0, %v1525
  %v1527 = vrcp.pop %v1183
  %v1528 = vmul.f32 %v1183, %v1527
  %v1529 = vsub.f32 1.0, %v1528
  %v1530 = vmul.f32 %v1527, %v1529
  %v1531 = vadd.f32 %v1527, %v1530
  %vm1532 = vweird.f32 %v1183
  %vm1533 = vweird.f32 %v1527
  %vm1534 = vmor %vm1532, %vm1533
  %v1535 = vsel %vm1534, %v1527, %v1531
  %v1536 = vand.u32 2147483647, %v1183
  %vm1537 = vcmp.eq.f32.partialorder %v1536, 8.507059e+37
  %v1538 = vand.u32 %v1183, 2147483648
  %v1539 = vor.u32 1.1754944e-38, %v1538
  %v1540 = vsel %vm1537, %v1539, %v1535
  %v1541 = vmul.f32 1.0, %v1540
  %v1542 = vrcp.pop %v1184
  %v1543 = vmul.f32 %v1184, %v1542
  %v1544 = vsub.f32 1.0, %v1543
  %v1545 = vmul.f32 %v1542, %v1544
  %v1546 = vadd.f32 %v1542, %v1545
  %vm1547 = vweird.f32 %v1184
  %vm1548 = vweird.f32 %v1542
  %vm1549 = vmor %vm1547, %vm1548
  %v1550 = vsel %vm1549, %v1542, %v1546
  %v1551 = vand.u32 2147483647, %v1184
  %vm1552 = vcmp.eq.f32.partialorder %v1551, 8.507059e+37
  %v1553 = vand.u32 %v1184, 2147483648
  %v1554 = vor.u32 1.1754944e-38, %v1553
  %v1555 = vsel %vm1552, %v1554, %v1550
  %v1556 = vmul.f32 1.0, %v1555
  %v1557 = vrcp.pop %v1185
  %v1558 = vmul.f32 %v1185, %v1557
  %v1559 = vsub.f32 1.0, %v1558
  %v1560 = vmul.f32 %v1557, %v1559
  %v1561 = vadd.f32 %v1557, %v1560
  %vm1562 = vweird.f32 %v1185
  %vm1563 = vweird.f32 %v1557
  %vm1564 = vmor %vm1562, %vm1563
  %v1565 = vsel %vm1564, %v1557, %v1561
  %v1566 = vand.u32 2147483647, %v1185
  %vm1567 = vcmp.eq.f32.partialorder %v1566, 8.507059e+37
  %v1568 = vand.u32 %v1185, 2147483648
  %v1569 = vor.u32 1.1754944e-38, %v1568
  %v1570 = vsel %vm1567, %v1569, %v1565
  %v1571 = vmul.f32 1.0, %v1570
  %v1572 = vrcp.pop %v1186
  %v1573 = vmul.f32 %v1186, %v1572
  %v1574 = vsub.f32 1.0, %v1573
  %v1575 = vmul.f32 %v1572, %v1574
  %v1576 = vadd.f32 %v1572, %v1575
  %vm1577 = vweird.f32 %v1186
  %vm1578 = vweird.f32 %v1572
  %vm1579 = vmor %vm1577, %vm1578
  %v1580 = vsel %vm1579, %v1572, %v1576
  %v1581 = vand.u32 2147483647, %v1186
  %vm1582 = vcmp.eq.f32.partialorder %v1581, 8.507059e+37
  %v1583 = vand.u32 %v1186, 2147483648
  %v1584 = vor.u32 1.1754944e-38, %v1583
  %v1585 = vsel %vm1582, %v1584, %v1580
  %v1586 = vmul.f32 1.0, %v1585
  %v1587 = vrcp.pop %v1187
  %v1588 = vmul.f32 %v1187, %v1587
  %v1589 = vsub.f32 1.0, %v1588
  %v1590 = vmul.f32 %v1587, %v1589
  %v1591 = vadd.f32 %v1587, %v1590
  %vm1592 = vweird.f32 %v1187
  %vm1593 = vweird.f32 %v1587
  %vm1594 = vmor %vm1592, %vm1593
  %v1595 = vsel %vm1594, %v1587, %v1591
  %v1596 = vand.u32 2147483647, %v1187
  %vm1597 = vcmp.eq.f32.partialorder %v1596, 8.507059e+37
  %v1598 = vand.u32 %v1187, 2147483648
  %v1599 = vor.u32 1.1754944e-38, %v1598
  %v1600 = vsel %vm1597, %v1599, %v1595
  %v1601 = vmul.f32 1.0, %v1600
  %v1602 = vrcp.pop %v1188
  %v1603 = vmul.f32 %v1188, %v1602
  %v1604 = vsub.f32 1.0, %v1603
  %v1605 = vmul.f32 %v1602, %v1604
  %v1606 = vadd.f32 %v1602, %v1605
  %vm1607 = vweird.f32 %v1188
  %vm1608 = vweird.f32 %v1602
  %vm1609 = vmor %vm1607, %vm1608
  %v1610 = vsel %vm1609, %v1602, %v1606
  %v1611 = vand.u32 2147483647, %v1188
  %vm1612 = vcmp.eq.f32.partialorder %v1611, 8.507059e+37
  %v1613 = vand.u32 %v1188, 2147483648
  %v1614 = vor.u32 1.1754944e-38, %v1613
  %v1615 = vsel %vm1612, %v1614, %v1610
  %v1616 = vmul.f32 1.0, %v1615
  %v1617 = vrcp.pop %v1189
  %v1618 = vmul.f32 %v1189, %v1617
  %v1619 = vsub.f32 1.0, %v1618
  %v1620 = vmul.f32 %v1617, %v1619
  %v1621 = vadd.f32 %v1617, %v1620
  %vm1622 = vweird.f32 %v1189
  %vm1623 = vweird.f32 %v1617
  %vm1624 = vmor %vm1622, %vm1623
  %v1625 = vsel %vm1624, %v1617, %v1621
  %v1626 = vand.u32 2147483647, %v1189
  %vm1627 = vcmp.eq.f32.partialorder %v1626, 8.507059e+37
  %v1628 = vand.u32 %v1189, 2147483648
  %v1629 = vor.u32 1.1754944e-38, %v1628
  %v1630 = vsel %vm1627, %v1629, %v1625
  %v1631 = vmul.f32 1.0, %v1630
  %v1632 = vrcp.pop %v1190
  %v1633 = vmul.f32 %v1190, %v1632
  %v1634 = vsub.f32 1.0, %v1633
  %v1635 = vmul.f32 %v1632, %v1634
  %v1636 = vadd.f32 %v1632, %v1635
  %vm1637 = vweird.f32 %v1190
  %vm1638 = vweird.f32 %v1632
  %vm1639 = vmor %vm1637, %vm1638
  %v1640 = vsel %vm1639, %v1632, %v1636
  %v1641 = vand.u32 2147483647, %v1190
  %vm1642 = vcmp.eq.f32.partialorder %v1641, 8.507059e+37
  %v1643 = vand.u32 %v1190, 2147483648
  %v1644 = vor.u32 1.1754944e-38, %v1643
  %v1645 = vsel %vm1642, %v1644, %v1640
  %v1646 = vmul.f32 1.0, %v1645
  %v1647 = vrcp.pop %v1191
  %v1648 = vmul.f32 %v1191, %v1647
  %v1649 = vsub.f32 1.0, %v1648
  %v1650 = vmul.f32 %v1647, %v1649
  %v1651 = vadd.f32 %v1647, %v1650
  %vm1652 = vweird.f32 %v1191
  %vm1653 = vweird.f32 %v1647
  %vm1654 = vmor %vm1652, %vm1653
  %v1655 = vsel %vm1654, %v1647, %v1651
  %v1656 = vand.u32 2147483647, %v1191
  %vm1657 = vcmp.eq.f32.partialorder %v1656, 8.507059e+37
  %v1658 = vand.u32 %v1191, 2147483648
  %v1659 = vor.u32 1.1754944e-38, %v1658
  %v1660 = vsel %vm1657, %v1659, %v1655
  %v1661 = vmul.f32 1.0, %v1660
  %v1662 = vrcp.pop %v1192
  %v1663 = vmul.f32 %v1192, %v1662
  %v1664 = vsub.f32 1.0, %v1663
  %v1665 = vmul.f32 %v1662, %v1664
  %v1666 = vadd.f32 %v1662, %v1665
  %vm1667 = vweird.f32 %v1192
  %vm1668 = vweird.f32 %v1662
  %vm1669 = vmor %vm1667, %vm1668
  %v1670 = vsel %vm1669, %v1662, %v1666
  %v1671 = vand.u32 2147483647, %v1192
  %vm1672 = vcmp.eq.f32.partialorder %v1671, 8.507059e+37
  %v1673 = vand.u32 %v1192, 2147483648
  %v1674 = vor.u32 1.1754944e-38, %v1673
  %v1675 = vsel %vm1672, %v1674, %v1670
  %v1676 = vmul.f32 1.0, %v1675
  %v1677 = vrcp.pop %v1193
  %v1678 = vmul.f32 %v1193, %v1677
  %v1679 = vsub.f32 1.0, %v1678
  %v1680 = vmul.f32 %v1677, %v1679
  %v1681 = vadd.f32 %v1677, %v1680
  %vm1682 = vweird.f32 %v1193
  %vm1683 = vweird.f32 %v1677
  %vm1684 = vmor %vm1682, %vm1683
  %v1685 = vsel %vm1684, %v1677, %v1681
  %v1686 = vand.u32 2147483647, %v1193
  %vm1687 = vcmp.eq.f32.partialorder %v1686, 8.507059e+37
  %v1688 = vand.u32 %v1193, 2147483648
  %v1689 = vor.u32 1.1754944e-38, %v1688
  %v1690 = vsel %vm1687, %v1689, %v1685
  %v1691 = vmul.f32 1.0, %v1690
  %v1692 = vrcp.pop %v1194
  %v1693 = vmul.f32 %v1194, %v1692
  %v1694 = vsub.f32 1.0, %v1693
  %v1695 = vmul.f32 %v1692, %v1694
  %v1696 = vadd.f32 %v1692, %v1695
  %vm1697 = vweird.f32 %v1194
  %vm1698 = vweird.f32 %v1692
  %vm1699 = vmor %vm1697, %vm1698
  %v1700 = vsel %vm1699, %v1692, %v1696
  %v1701 = vand.u32 2147483647, %v1194
  %vm1702 = vcmp.eq.f32.partialorder %v1701, 8.507059e+37
  %v1703 = vand.u32 %v1194, 2147483648
  %v1704 = vor.u32 1.1754944e-38, %v1703
  %v1705 = vsel %vm1702, %v1704, %v1700
  %v1706 = vmul.f32 1.0, %v1705
  %v1707 = vrcp.pop %v1195
  %v1708 = vmul.f32 %v1195, %v1707
  %v1709 = vsub.f32 1.0, %v1708
  %v1710 = vmul.f32 %v1707, %v1709
  %v1711 = vadd.f32 %v1707, %v1710
  %vm1712 = vweird.f32 %v1195
  %vm1713 = vweird.f32 %v1707
  %vm1714 = vmor %vm1712, %vm1713
  %v1715 = vsel %vm1714, %v1707, %v1711
  %v1716 = vand.u32 2147483647, %v1195
  %vm1717 = vcmp.eq.f32.partialorder %v1716, 8.507059e+37
  %v1718 = vand.u32 %v1195, 2147483648
  %v1719 = vor.u32 1.1754944e-38, %v1718
  %v1720 = vsel %vm1717, %v1719, %v1715
  %v1721 = vmul.f32 1.0, %v1720
  %v1722 = vrcp.pop %v1196
  %v1723 = vmul.f32 %v1196, %v1722
  %v1724 = vsub.f32 1.0, %v1723
  %v1725 = vmul.f32 %v1722, %v1724
  %v1726 = vadd.f32 %v1722, %v1725
  %vm1727 = vweird.f32 %v1196
  %vm1728 = vweird.f32 %v1722
  %vm1729 = vmor %vm1727, %vm1728
  %v1730 = vsel %vm1729, %v1722, %v1726
  %v1731 = vand.u32 2147483647, %v1196
  %vm1732 = vcmp.eq.f32.partialorder %v1731, 8.507059e+37
  %v1733 = vand.u32 %v1196, 2147483648
  %v1734 = vor.u32 1.1754944e-38, %v1733
  %v1735 = vsel %vm1732, %v1734, %v1730
  %v1736 = vmul.f32 1.0, %v1735
  %v1737 = vrcp.pop %v1197
  %v1738 = vmul.f32 %v1197, %v1737
  %v1739 = vsub.f32 1.0, %v1738
  %v1740 = vmul.f32 %v1737, %v1739
  %v1741 = vadd.f32 %v1737, %v1740
  %vm1742 = vweird.f32 %v1197
  %vm1743 = vweird.f32 %v1737
  %vm1744 = vmor %vm1742, %vm1743
  %v1745 = vsel %vm1744, %v1737, %v1741
  %v1746 = vand.u32 2147483647, %v1197
  %vm1747 = vcmp.eq.f32.partialorder %v1746, 8.507059e+37
  %v1748 = vand.u32 %v1197, 2147483648
  %v1749 = vor.u32 1.1754944e-38, %v1748
  %v1750 = vsel %vm1747, %v1749, %v1745
  %v1751 = vmul.f32 1.0, %v1750
  %v1752 = vrcp.pop %v1198
  %v1753 = vmul.f32 %v1198, %v1752
  %v1754 = vsub.f32 1.0, %v1753
  %v1755 = vmul.f32 %v1752, %v1754
  %v1756 = vadd.f32 %v1752, %v1755
  %vm1757 = vweird.f32 %v1198
  %vm1758 = vweird.f32 %v1752
  %vm1759 = vmor %vm1757, %vm1758
  %v1760 = vsel %vm1759, %v1752, %v1756
  %v1761 = vand.u32 2147483647, %v1198
  %vm1762 = vcmp.eq.f32.partialorder %v1761, 8.507059e+37
  %v1763 = vand.u32 %v1198, 2147483648
  %v1764 = vor.u32 1.1754944e-38, %v1763
  %v1765 = vsel %vm1762, %v1764, %v1760
  %v1766 = vmul.f32 1.0, %v1765
  %v1767 = vrcp.pop %v1199
  %v1768 = vmul.f32 %v1199, %v1767
  %v1769 = vsub.f32 1.0, %v1768
  %v1770 = vmul.f32 %v1767, %v1769
  %v1771 = vadd.f32 %v1767, %v1770
  %vm1772 = vweird.f32 %v1199
  %vm1773 = vweird.f32 %v1767
  %vm1774 = vmor %vm1772, %vm1773
  %v1775 = vsel %vm1774, %v1767, %v1771
  %v1776 = vand.u32 2147483647, %v1199
  %vm1777 = vcmp.eq.f32.partialorder %v1776, 8.507059e+37
  %v1778 = vand.u32 %v1199, 2147483648
  %v1779 = vor.u32 1.1754944e-38, %v1778
  %v1780 = vsel %vm1777, %v1779, %v1775
  %v1781 = vmul.f32 1.0, %v1780
  %v1782 = vrcp.pop %v1200
  %v1783 = vmul.f32 %v1200, %v1782
  %v1784 = vsub.f32 1.0, %v1783
  %v1785 = vmul.f32 %v1782, %v1784
  %v1786 = vadd.f32 %v1782, %v1785
  %vm1787 = vweird.f32 %v1200
  %vm1788 = vweird.f32 %v1782
  %vm1789 = vmor %vm1787, %vm1788
  %v1790 = vsel %vm1789, %v1782, %v1786
  %v1791 = vand.u32 2147483647, %v1200
  %vm1792 = vcmp.eq.f32.partialorder %v1791, 8.507059e+37
  %v1793 = vand.u32 %v1200, 2147483648
  %v1794 = vor.u32 1.1754944e-38, %v1793
  %v1795 = vsel %vm1792, %v1794, %v1790
  %v1796 = vmul.f32 1.0, %v1795
  %v1797 = vrcp.pop %v1201
  %v1798 = vmul.f32 %v1201, %v1797
  %v1799 = vsub.f32 1.0, %v1798
  %v1800 = vmul.f32 %v1797, %v1799
  %v1801 = vadd.f32 %v1797, %v1800
  %vm1802 = vweird.f32 %v1201
  %vm1803 = vweird.f32 %v1797
  %vm1804 = vmor %vm1802, %vm1803
  %v1805 = vsel %vm1804, %v1797, %v1801
  %v1806 = vand.u32 2147483647, %v1201
  %vm1807 = vcmp.eq.f32.partialorder %v1806, 8.507059e+37
  %v1808 = vand.u32 %v1201, 2147483648
  %v1809 = vor.u32 1.1754944e-38, %v1808
  %v1810 = vsel %vm1807, %v1809, %v1805
  %v1811 = vmul.f32 1.0, %v1810
  %v1812 = vrcp.pop %v1202
  %v1813 = vmul.f32 %v1202, %v1812
  %v1814 = vsub.f32 1.0, %v1813
  %v1815 = vmul.f32 %v1812, %v1814
  %v1816 = vadd.f32 %v1812, %v1815
  %vm1817 = vweird.f32 %v1202
  %vm1818 = vweird.f32 %v1812
  %vm1819 = vmor %vm1817, %vm1818
  %v1820 = vsel %vm1819, %v1812, %v1816
  %v1821 = vand.u32 2147483647, %v1202
  %vm1822 = vcmp.eq.f32.partialorder %v1821, 8.507059e+37
  %v1823 = vand.u32 %v1202, 2147483648
  %v1824 = vor.u32 1.1754944e-38, %v1823
  %v1825 = vsel %vm1822, %v1824, %v1820
  %v1826 = vmul.f32 1.0, %v1825
  %v1827 = vrcp.pop %v1203
  %v1828 = vmul.f32 %v1203, %v1827
  %v1829 = vsub.f32 1.0, %v1828
  %v1830 = vmul.f32 %v1827, %v1829
  %v1831 = vadd.f32 %v1827, %v1830
  %vm1832 = vweird.f32 %v1203
  %vm1833 = vweird.f32 %v1827
  %vm1834 = vmor %vm1832, %vm1833
  %v1835 = vsel %vm1834, %v1827, %v1831
  %v1836 = vand.u32 2147483647, %v1203
  %vm1837 = vcmp.eq.f32.partialorder %v1836, 8.507059e+37
  %v1838 = vand.u32 %v1203, 2147483648
  %v1839 = vor.u32 1.1754944e-38, %v1838
  %v1840 = vsel %vm1837, %v1839, %v1835
  %v1841 = vmul.f32 1.0, %v1840
  %v1842 = vrcp.pop %v1204
  %v1843 = vmul.f32 %v1204, %v1842
  %v1844 = vsub.f32 1.0, %v1843
  %v1845 = vmul.f32 %v1842, %v1844
  %v1846 = vadd.f32 %v1842, %v1845
  %vm1847 = vweird.f32 %v1204
  %vm1848 = vweird.f32 %v1842
  %vm1849 = vmor %vm1847, %vm1848
  %v1850 = vsel %vm1849, %v1842, %v1846
  %v1851 = vand.u32 2147483647, %v1204
  %vm1852 = vcmp.eq.f32.partialorder %v1851, 8.507059e+37
  %v1853 = vand.u32 %v1204, 2147483648
  %v1854 = vor.u32 1.1754944e-38, %v1853
  %v1855 = vsel %vm1852, %v1854, %v1850
  %v1856 = vmul.f32 1.0, %v1855
  %v1857 = vrcp.pop %v1205
  %v1858 = vmul.f32 %v1205, %v1857
  %v1859 = vsub.f32 1.0, %v1858
  %v1860 = vmul.f32 %v1857, %v1859
  %v1861 = vadd.f32 %v1857, %v1860
  %vm1862 = vweird.f32 %v1205
  %vm1863 = vweird.f32 %v1857
  %vm1864 = vmor %vm1862, %vm1863
  %v1865 = vsel %vm1864, %v1857, %v1861
  %v1866 = vand.u32 2147483647, %v1205
  %vm1867 = vcmp.eq.f32.partialorder %v1866, 8.507059e+37
  %v1868 = vand.u32 %v1205, 2147483648
  %v1869 = vor.u32 1.1754944e-38, %v1868
  %v1870 = vsel %vm1867, %v1869, %v1865
  %v1871 = vmul.f32 1.0, %v1870
  %v1872 = vrcp.pop %v1206
  %v1873 = vmul.f32 %v1206, %v1872
  %v1874 = vsub.f32 1.0, %v1873
  %v1875 = vmul.f32 %v1872, %v1874
  %v1876 = vadd.f32 %v1872, %v1875
  %vm1877 = vweird.f32 %v1206
  %vm1878 = vweird.f32 %v1872
  %vm1879 = vmor %vm1877, %vm1878
  %v1880 = vsel %vm1879, %v1872, %v1876
  %v1881 = vand.u32 2147483647, %v1206
  %vm1882 = vcmp.eq.f32.partialorder %v1881, 8.507059e+37
  %v1883 = vand.u32 %v1206, 2147483648
  %v1884 = vor.u32 1.1754944e-38, %v1883
  %v1885 = vsel %vm1882, %v1884, %v1880
  %v1886 = vmul.f32 1.0, %v1885
  %v1887 = vrcp.pop %v1207
  %v1888 = vmul.f32 %v1207, %v1887
  %v1889 = vsub.f32 1.0, %v1888
  %v1890 = vmul.f32 %v1887, %v1889
  %v1891 = vadd.f32 %v1887, %v1890
  %vm1892 = vweird.f32 %v1207
  %vm1893 = vweird.f32 %v1887
  %vm1894 = vmor %vm1892, %vm1893
  %v1895 = vsel %vm1894, %v1887, %v1891
  %v1896 = vand.u32 2147483647, %v1207
  %vm1897 = vcmp.eq.f32.partialorder %v1896, 8.507059e+37
  %v1898 = vand.u32 %v1207, 2147483648
  %v1899 = vor.u32 1.1754944e-38, %v1898
  %v1900 = vsel %vm1897, %v1899, %v1895
  %v1901 = vmul.f32 1.0, %v1900
  %v1902 = vrcp.pop %v1208
  %v1903 = vmul.f32 %v1208, %v1902
  %v1904 = vsub.f32 1.0, %v1903
  %v1905 = vmul.f32 %v1902, %v1904
  %v1906 = vadd.f32 %v1902, %v1905
  %vm1907 = vweird.f32 %v1208
  %vm1908 = vweird.f32 %v1902
  %vm1909 = vmor %vm1907, %vm1908
  %v1910 = vsel %vm1909, %v1902, %v1906
  %v1911 = vand.u32 2147483647, %v1208
  %vm1912 = vcmp.eq.f32.partialorder %v1911, 8.507059e+37
  %v1913 = vand.u32 %v1208, 2147483648
  %v1914 = vor.u32 1.1754944e-38, %v1913
  %v1915 = vsel %vm1912, %v1914, %v1910
  %v1916 = vmul.f32 1.0, %v1915
  %v1917 = vrcp.pop %v1209
  %v1918 = vmul.f32 %v1209, %v1917
  %v1919 = vsub.f32 1.0, %v1918
  %v1920 = vmul.f32 %v1917, %v1919
  %v1921 = vadd.f32 %v1917, %v1920
  %vm1922 = vweird.f32 %v1209
  %vm1923 = vweird.f32 %v1917
  %vm1924 = vmor %vm1922, %vm1923
  %v1925 = vsel %vm1924, %v1917, %v1921
  %v1926 = vand.u32 2147483647, %v1209
  %vm1927 = vcmp.eq.f32.partialorder %v1926, 8.507059e+37
  %v1928 = vand.u32 %v1209, 2147483648
  %v1929 = vor.u32 1.1754944e-38, %v1928
  %v1930 = vsel %vm1927, %v1929, %v1925
  %v1931 = vmul.f32 1.0, %v1930
  %v1932 = vrcp.pop %v1210
  %v1933 = vmul.f32 %v1210, %v1932
  %v1934 = vsub.f32 1.0, %v1933
  %v1935 = vmul.f32 %v1932, %v1934
  %v1936 = vadd.f32 %v1932, %v1935
  %vm1937 = vweird.f32 %v1210
  %vm1938 = vweird.f32 %v1932
  %vm1939 = vmor %vm1937, %vm1938
  %v1940 = vsel %vm1939, %v1932, %v1936
  %v1941 = vand.u32 2147483647, %v1210
  %vm1942 = vcmp.eq.f32.partialorder %v1941, 8.507059e+37
  %v1943 = vand.u32 %v1210, 2147483648
  %v1944 = vor.u32 1.1754944e-38, %v1943
  %v1945 = vsel %vm1942, %v1944, %v1940
  %v1946 = vmul.f32 1.0, %v1945
  %v1947 = vrcp.pop %v1211
  %v1948 = vmul.f32 %v1211, %v1947
  %v1949 = vsub.f32 1.0, %v1948
  %v1950 = vmul.f32 %v1947, %v1949
  %v1951 = vadd.f32 %v1947, %v1950
  %vm1952 = vweird.f32 %v1211
  %vm1953 = vweird.f32 %v1947
  %vm1954 = vmor %vm1952, %vm1953
  %v1955 = vsel %vm1954, %v1947, %v1951
  %v1956 = vand.u32 2147483647, %v1211
  %vm1957 = vcmp.eq.f32.partialorder %v1956, 8.507059e+37
  %v1958 = vand.u32 %v1211, 2147483648
  %v1959 = vor.u32 1.1754944e-38, %v1958
  %v1960 = vsel %vm1957, %v1959, %v1955
  %v1961 = vmul.f32 1.0, %v1960
  %v1962 = vrcp.pop %v1212
  %v1963 = vmul.f32 %v1212, %v1962
  %v1964 = vsub.f32 1.0, %v1963
  %v1965 = vmul.f32 %v1962, %v1964
  %v1966 = vadd.f32 %v1962, %v1965
  %vm1967 = vweird.f32 %v1212
  %vm1968 = vweird.f32 %v1962
  %vm1969 = vmor %vm1967, %vm1968
  %v1970 = vsel %vm1969, %v1962, %v1966
  %v1971 = vand.u32 2147483647, %v1212
  %vm1972 = vcmp.eq.f32.partialorder %v1971, 8.507059e+37
  %v1973 = vand.u32 %v1212, 2147483648
  %v1974 = vor.u32 1.1754944e-38, %v1973
  %v1975 = vsel %vm1972, %v1974, %v1970
  %v1976 = vmul.f32 1.0, %v1975
  %v1977 = vrcp.pop %v1213
  %v1978 = vmul.f32 %v1213, %v1977
  %v1979 = vsub.f32 1.0, %v1978
  %v1980 = vmul.f32 %v1977, %v1979
  %v1981 = vadd.f32 %v1977, %v1980
  %vm1982 = vweird.f32 %v1213
  %vm1983 = vweird.f32 %v1977
  %vm1984 = vmor %vm1982, %vm1983
  %v1985 = vsel %vm1984, %v1977, %v1981
  %v1986 = vand.u32 2147483647, %v1213
  %vm1987 = vcmp.eq.f32.partialorder %v1986, 8.507059e+37
  %v1988 = vand.u32 %v1213, 2147483648
  %v1989 = vor.u32 1.1754944e-38, %v1988
  %v1990 = vsel %vm1987, %v1989, %v1985
  %v1991 = vmul.f32 1.0, %v1990
  %v1992 = vrcp.pop %v1214
  %v1993 = vmul.f32 %v1214, %v1992
  %v1994 = vsub.f32 1.0, %v1993
  %v1995 = vmul.f32 %v1992, %v1994
  %v1996 = vadd.f32 %v1992, %v1995
  %vm1997 = vweird.f32 %v1214
  %vm1998 = vweird.f32 %v1992
  %vm1999 = vmor %vm1997, %vm1998
  %v2000 = vsel %vm1999, %v1992, %v1996
  %v2001 = vand.u32 2147483647, %v1214
  %vm2002 = vcmp.eq.f32.partialorder %v2001, 8.507059e+37
  %v2003 = vand.u32 %v1214, 2147483648
  %v2004 = vor.u32 1.1754944e-38, %v2003
  %v2005 = vsel %vm2002, %v2004, %v2000
  %v2006 = vmul.f32 1.0, %v2005
  %v2007 = vrcp.pop %v1215
  %v2008 = vmul.f32 %v1215, %v2007
  %v2009 = vsub.f32 1.0, %v2008
  %v2010 = vmul.f32 %v2007, %v2009
  %v2011 = vadd.f32 %v2007, %v2010
  %vm2012 = vweird.f32 %v1215
  %vm2013 = vweird.f32 %v2007
  %vm2014 = vmor %vm2012, %vm2013
  %v2015 = vsel %vm2014, %v2007, %v2011
  %v2016 = vand.u32 2147483647, %v1215
  %vm2017 = vcmp.eq.f32.partialorder %v2016, 8.507059e+37
  %v2018 = vand.u32 %v1215, 2147483648
  %v2019 = vor.u32 1.1754944e-38, %v2018
  %v2020 = vsel %vm2017, %v2019, %v2015
  %v2021 = vmul.f32 1.0, %v2020
  %v2022 = vrcp.pop %v1216
  %v2023 = vmul.f32 %v1216, %v2022
  %v2024 = vsub.f32 1.0, %v2023
  %v2025 = vmul.f32 %v2022, %v2024
  %v2026 = vadd.f32 %v2022, %v2025
  %vm2027 = vweird.f32 %v1216
  %vm2028 = vweird.f32 %v2022
  %vm2029 = vmor %vm2027, %vm2028
  %v2030 = vsel %vm2029, %v2022, %v2026
  %v2031 = vand.u32 2147483647, %v1216
  %vm2032 = vcmp.eq.f32.partialorder %v2031, 8.507059e+37
  %v2033 = vand.u32 %v1216, 2147483648
  %v2034 = vor.u32 1.1754944e-38, %v2033
  %v2035 = vsel %vm2032, %v2034, %v2030
  %v2036 = vmul.f32 1.0, %v2035
  %v2037 = vrcp.pop %v1217
  %v2038 = vmul.f32 %v1217, %v2037
  %v2039 = vsub.f32 1.0, %v2038
  %v2040 = vmul.f32 %v2037, %v2039
  %v2041 = vadd.f32 %v2037, %v2040
  %vm2042 = vweird.f32 %v1217
  %vm2043 = vweird.f32 %v2037
  %vm2044 = vmor %vm2042, %vm2043
  %v2045 = vsel %vm2044, %v2037, %v2041
  %v2046 = vand.u32 2147483647, %v1217
  %vm2047 = vcmp.eq.f32.partialorder %v2046, 8.507059e+37
  %v2048 = vand.u32 %v1217, 2147483648
  %v2049 = vor.u32 1.1754944e-38, %v2048
  %v2050 = vsel %vm2047, %v2049, %v2045
  %v2051 = vmul.f32 1.0, %v2050
  %v2052 = vrcp.pop %v1218
  %v2053 = vmul.f32 %v1218, %v2052
  %v2054 = vsub.f32 1.0, %v2053
  %v2055 = vmul.f32 %v2052, %v2054
  %v2056 = vadd.f32 %v2052, %v2055
  %vm2057 = vweird.f32 %v1218
  %vm2058 = vweird.f32 %v2052
  %vm2059 = vmor %vm2057, %vm2058
  %v2060 = vsel %vm2059, %v2052, %v2056
  %v2061 = vand.u32 2147483647, %v1218
  %vm2062 = vcmp.eq.f32.partialorder %v2061, 8.507059e+37
  %v2063 = vand.u32 %v1218, 2147483648
  %v2064 = vor.u32 1.1754944e-38, %v2063
  %v2065 = vsel %vm2062, %v2064, %v2060
  %v2066 = vmul.f32 1.0, %v2065
  %v2067 = vrcp.pop %v1219
  %v2068 = vmul.f32 %v1219, %v2067
  %v2069 = vsub.f32 1.0, %v2068
  %v2070 = vmul.f32 %v2067, %v2069
  %v2071 = vadd.f32 %v2067, %v2070
  %vm2072 = vweird.f32 %v1219
  %vm2073 = vweird.f32 %v2067
  %vm2074 = vmor %vm2072, %vm2073
  %v2075 = vsel %vm2074, %v2067, %v2071
  %v2076 = vand.u32 2147483647, %v1219
  %vm2077 = vcmp.eq.f32.partialorder %v2076, 8.507059e+37
  %v2078 = vand.u32 %v1219, 2147483648
  %v2079 = vor.u32 1.1754944e-38, %v2078
  %v2080 = vsel %vm2077, %v2079, %v2075
  %v2081 = vmul.f32 1.0, %v2080
  %v2082 = vrcp.pop %v1220
  %v2083 = vmul.f32 %v1220, %v2082
  %v2084 = vsub.f32 1.0, %v2083
  %v2085 = vmul.f32 %v2082, %v2084
  %v2086 = vadd.f32 %v2082, %v2085
  %vm2087 = vweird.f32 %v1220
  %vm2088 = vweird.f32 %v2082
  %vm2089 = vmor %vm2087, %vm2088
  %v2090 = vsel %vm2089, %v2082, %v2086
  %v2091 = vand.u32 2147483647, %v1220
  %vm2092 = vcmp.eq.f32.partialorder %v2091, 8.507059e+37
  %v2093 = vand.u32 %v1220, 2147483648
  %v2094 = vor.u32 1.1754944e-38, %v2093
  %v2095 = vsel %vm2092, %v2094, %v2090
  %v2096 = vmul.f32 1.0, %v2095
  %v2097 = vrcp.pop %v1221
  %v2098 = vmul.f32 %v1221, %v2097
  %v2099 = vsub.f32 1.0, %v2098
  %v2100 = vmul.f32 %v2097, %v2099
  %v2101 = vadd.f32 %v2097, %v2100
  %vm2102 = vweird.f32 %v1221
  %vm2103 = vweird.f32 %v2097
  %vm2104 = vmor %vm2102, %vm2103
  %v2105 = vsel %vm2104, %v2097, %v2101
  %v2106 = vand.u32 2147483647, %v1221
  %vm2107 = vcmp.eq.f32.partialorder %v2106, 8.507059e+37
  %v2108 = vand.u32 %v1221, 2147483648
  %v2109 = vor.u32 1.1754944e-38, %v2108
  %v2110 = vsel %vm2107, %v2109, %v2105
  %v2111 = vmul.f32 1.0, %v2110
  %v2112 = vrcp.pop %v1222
  %v2113 = vmul.f32 %v1222, %v2112
  %v2114 = vsub.f32 1.0, %v2113
  %v2115 = vmul.f32 %v2112, %v2114
  %v2116 = vadd.f32 %v2112, %v2115
  %vm2117 = vweird.f32 %v1222
  %vm2118 = vweird.f32 %v2112
  %vm2119 = vmor %vm2117, %vm2118
  %v2120 = vsel %vm2119, %v2112, %v2116
  %v2121 = vand.u32 2147483647, %v1222
  %vm2122 = vcmp.eq.f32.partialorder %v2121, 8.507059e+37
  %v2123 = vand.u32 %v1222, 2147483648
  %v2124 = vor.u32 1.1754944e-38, %v2123
  %v2125 = vsel %vm2122, %v2124, %v2120
  %v2126 = vmul.f32 1.0, %v2125
  %v2127 = vrcp.pop %v1223
  %v2128 = vmul.f32 %v1223, %v2127
  %v2129 = vsub.f32 1.0, %v2128
  %v2130 = vmul.f32 %v2127, %v2129
  %v2131 = vadd.f32 %v2127, %v2130
  %vm2132 = vweird.f32 %v1223
  %vm2133 = vweird.f32 %v2127
  %vm2134 = vmor %vm2132, %vm2133
  %v2135 = vsel %vm2134, %v2127, %v2131
  %v2136 = vand.u32 2147483647, %v1223
  %vm2137 = vcmp.eq.f32.partialorder %v2136, 8.507059e+37
  %v2138 = vand.u32 %v1223, 2147483648
  %v2139 = vor.u32 1.1754944e-38, %v2138
  %v2140 = vsel %vm2137, %v2139, %v2135
  %v2141 = vmul.f32 1.0, %v2140
  %v2142 = vrcp.pop %v1224
  %v2143 = vmul.f32 %v1224, %v2142
  %v2144 = vsub.f32 1.0, %v2143
  %v2145 = vmul.f32 %v2142, %v2144
  %v2146 = vadd.f32 %v2142, %v2145
  %vm2147 = vweird.f32 %v1224
  %vm2148 = vweird.f32 %v2142
  %vm2149 = vmor %vm2147, %vm2148
  %v2150 = vsel %vm2149, %v2142, %v2146
  %v2151 = vand.u32 2147483647, %v1224
  %vm2152 = vcmp.eq.f32.partialorder %v2151, 8.507059e+37
  %v2153 = vand.u32 %v1224, 2147483648
  %v2154 = vor.u32 1.1754944e-38, %v2153
  %v2155 = vsel %vm2152, %v2154, %v2150
  %v2156 = vmul.f32 1.0, %v2155
  %v2157 = vrcp.pop %v1225
  %v2158 = vmul.f32 %v1225, %v2157
  %v2159 = vsub.f32 1.0, %v2158
  %v2160 = vmul.f32 %v2157, %v2159
  %v2161 = vadd.f32 %v2157, %v2160
  %vm2162 = vweird.f32 %v1225
  %vm2163 = vweird.f32 %v2157
  %vm2164 = vmor %vm2162, %vm2163
  %v2165 = vsel %vm2164, %v2157, %v2161
  %v2166 = vand.u32 2147483647, %v1225
  %vm2167 = vcmp.eq.f32.partialorder %v2166, 8.507059e+37
  %v2168 = vand.u32 %v1225, 2147483648
  %v2169 = vor.u32 1.1754944e-38, %v2168
  %v2170 = vsel %vm2167, %v2169, %v2165
  %v2171 = vmul.f32 1.0, %v2170
  %v2172 = vrcp.pop %v1226
  %v2173 = vmul.f32 %v1226, %v2172
  %v2174 = vsub.f32 1.0, %v2173
  %v2175 = vmul.f32 %v2172, %v2174
  %v2176 = vadd.f32 %v2172, %v2175
  %vm2177 = vweird.f32 %v1226
  %vm2178 = vweird.f32 %v2172
  %vm2179 = vmor %vm2177, %vm2178
  %v2180 = vsel %vm2179, %v2172, %v2176
  %v2181 = vand.u32 2147483647, %v1226
  %vm2182 = vcmp.eq.f32.partialorder %v2181, 8.507059e+37
  %v2183 = vand.u32 %v1226, 2147483648
  %v2184 = vor.u32 1.1754944e-38, %v2183
  %v2185 = vsel %vm2182, %v2184, %v2180
  %v2186 = vmul.f32 1.0, %v2185
  %2187 = vst.msk [vmem:[%s5] sm:$0xff] %vm90, %v1241
  %2188 = vst.msk [vmem:[%s5 + $0x8] sm:$0xff] %vm90, %v1256
  %2189 = vst.msk [vmem:[%s5 + $0x10] sm:$0xff] %vm90, %v1271
  %2190 = vst.msk [vmem:[%s5 + $0x18] sm:$0xff] %vm90, %v1286
  %2191 = vst.msk [vmem:[%s5 + $0x20] sm:$0xff] %vm90, %v1301
  %2192 = vst.msk [vmem:[%s5 + $0x28] sm:$0xff] %vm90, %v1316
  %2193 = vst.msk [vmem:[%s5 + $0x30] sm:$0xff] %vm90, %v1331
  %2194 = vst.msk [vmem:[%s5 + $0x38] sm:$0xff] %vm90, %v1346
  %2195 = vst.msk [vmem:[%s5 + $0x40] sm:$0xff] %vm90, %v1361
  %2196 = vst.msk [vmem:[%s5 + $0x48] sm:$0xff] %vm90, %v1376
  %2197 = vst.msk [vmem:[%s5 + $0x50] sm:$0xff] %vm90, %v1391
  %2198 = vst.msk [vmem:[%s5 + $0x58] sm:$0xff] %vm90, %v1406
  %2199 = vst.msk [vmem:[%s5 + $0x60] sm:$0xff] %vm90, %v1421
  %2200 = vst.msk [vmem:[%s5 + $0x68] sm:$0xff] %vm90, %v1436
  %2201 = vst.msk [vmem:[%s5 + $0x70] sm:$0xff] %vm90, %v1451
  %2202 = vst.msk [vmem:[%s5 + $0x78] sm:$0xff] %vm90, %v1466
  %2203 = vst.msk [vmem:[%s5 + $0x80] sm:$0xff] %vm90, %v1481
  %2204 = vst.msk [vmem:[%s5 + $0x88] sm:$0xff] %vm90, %v1496
  %2205 = vst.msk [vmem:[%s5 + $0x90] sm:$0xff] %vm90, %v1511
  %2206 = vst.msk [vmem:[%s5 + $0x98] sm:$0xff] %vm90, %v1526
  %2207 = vst.msk [vmem:[%s5 + $0xa0] sm:$0xff] %vm90, %v1541
  %2208 = vst.msk [vmem:[%s5 + $0xa8] sm:$0xff] %vm90, %v1556
  %2209 = vst.msk [vmem:[%s5 + $0xb0] sm:$0xff] %vm90, %v1571
  %2210 = vst.msk [vmem:[%s5 + $0xb8] sm:$0xff] %vm90, %v1586
  %2211 = vst.msk [vmem:[%s5 + $0xc0] sm:$0xff] %vm90, %v1601
  %2212 = vst.msk [vmem:[%s5 + $0xc8] sm:$0xff] %vm90, %v1616
  %2213 = vst.msk [vmem:[%s5 + $0xd0] sm:$0xff] %vm90, %v1631
  %2214 = vst.msk [vmem:[%s5 + $0xd8] sm:$0xff] %vm90, %v1646
  %2215 = vst.msk [vmem:[%s5 + $0xe0] sm:$0xff] %vm90, %v1661
  %2216 = vst.msk [vmem:[%s5 + $0xe8] sm:$0xff] %vm90, %v1676
  %2217 = vst.msk [vmem:[%s5 + $0xf0] sm:$0xff] %vm90, %v1691
  %2218 = vst.msk [vmem:[%s5 + $0xf8] sm:$0xff] %vm90, %v1706
  %2219 = vst.msk [vmem:[%s5 + $0x100] sm:$0xff] %vm90, %v1721
  %2220 = vst.msk [vmem:[%s5 + $0x108] sm:$0xff] %vm90, %v1736
  %2221 = vst.msk [vmem:[%s5 + $0x110] sm:$0xff] %vm90, %v1751
  %2222 = vst.msk [vmem:[%s5 + $0x118] sm:$0xff] %vm90, %v1766
  %2223 = vst.msk [vmem:[%s5 + $0x120] sm:$0xff] %vm90, %v1781
  %2224 = vst.msk [vmem:[%s5 + $0x128] sm:$0xff] %vm90, %v1796
  %2225 = vst.msk [vmem:[%s5 + $0x130] sm:$0xff] %vm90, %v1811
  %2226 = vst.msk [vmem:[%s5 + $0x138] sm:$0xff] %vm90, %v1826
  %2227 = vst.msk [vmem:[%s5 + $0x140] sm:$0xff] %vm90, %v1841
  %2228 = vst.msk [vmem:[%s5 + $0x148] sm:$0xff] %vm90, %v1856
  %2229 = vst.msk [vmem:[%s5 + $0x150] sm:$0xff] %vm90, %v1871
  %2230 = vst.msk [vmem:[%s5 + $0x158] sm:$0xff] %vm90, %v1886
  %2231 = vst.msk [vmem:[%s5 + $0x160] sm:$0xff] %vm90, %v1901
  %2232 = vst.msk [vmem:[%s5 + $0x168] sm:$0xff] %vm90, %v1916
  %2233 = vst.msk [vmem:[%s5 + $0x170] sm:$0xff] %vm90, %v1931
  %2234 = vst.msk [vmem:[%s5 + $0x178] sm:$0xff] %vm90, %v1946
  %2235 = vst.msk [vmem:[%s5 + $0x180] sm:$0xff] %vm90, %v1961
  %2236 = vst.msk [vmem:[%s5 + $0x188] sm:$0xff] %vm90, %v1976
  %2237 = vst.msk [vmem:[%s5 + $0x190] sm:$0xff] %vm90, %v1991
  %2238 = vst.msk [vmem:[%s5 + $0x198] sm:$0xff] %vm90, %v2006
  %2239 = vst.msk [vmem:[%s5 + $0x1a0] sm:$0xff] %vm90, %v2021
  %2240 = vst.msk [vmem:[%s5 + $0x1a8] sm:$0xff] %vm90, %v2036
  %2241 = vst.msk [vmem:[%s5 + $0x1b0] sm:$0xff] %vm90, %v2051
  %2242 = vst.msk [vmem:[%s5 + $0x1b8] sm:$0xff] %vm90, %v2066
  %2243 = vst.msk [vmem:[%s5 + $0x1c0] sm:$0xff] %vm90, %v2081
  %2244 = vst.msk [vmem:[%s5 + $0x1c8] sm:$0xff] %vm90, %v2096
  %2245 = vst.msk [vmem:[%s5 + $0x1d0] sm:$0xff] %vm90, %v2111
  %2246 = vst.msk [vmem:[%s5 + $0x1d8] sm:$0xff] %vm90, %v2126
  %2247 = vst.msk [vmem:[%s5 + $0x1e0] sm:$0xff] %vm90, %v2141
  %2248 = vst.msk [vmem:[%s5 + $0x1e8] sm:$0xff] %vm90, %v2156
  %2249 = vst.msk [vmem:[%s5 + $0x1f0] sm:$0xff] %vm90, %v2171
  %2250 = vst.msk [vmem:[%s5 + $0x1f8] sm:$0xff] %vm90, %v2186
  // Predicated region
  $region22: #{tpu_custom_call.1} parent=0 // pred_check
    _
  $region23: #{tpu_custom_call.1} parent=0 // pred_check_branch
    %2252 = sbr.rel (0) target = $region25
  $region24: #{tpu_custom_call.1} parent=0 // pred_region
    _
  $region25: #{tpu_custom_call.1} parent=0 // pred_fallthru
    _
  // Predicated region
  $region26: #{tpu_custom_call.1} parent=0 // pred_check
    _
  $region27: #{tpu_custom_call.1} parent=0 // pred_check_branch
    %2254 = sbr.rel (0) target = $region29
  $region28: #{tpu_custom_call.1} parent=0 // pred_region
    _
  $region29: #{tpu_custom_call.1} parent=0 // pred_fallthru
    _

</llo_original>
